<compile_context>
chip_gen: v7x
topology: tpu7x:2x2x1
jax: 0.10.0
libtpu: 0.0.40
codegen_flags: <defaults>
</compile_context>

<pallas_src>
import jax
import jax.numpy as jnp
from jax.experimental import pallas as pl
from jax.experimental.pallas import tpu as pltpu

BN_EPS = 1e-5
MiB = 1 << 20


def _round_up(x, m):
    return ((x + m - 1) // m) * m


def _vmem_capacity_bytes(default=64 * MiB):
    """Per-TensorCore VMEM capacity; conservative (v7x-sized) default if unavailable."""
    try:
        return int(pltpu.get_tpu_info().vmem_capacity_bytes)
    except Exception:
        return default


# --------------------------------------------------------------------------- kernel
def qnet_kernel(x_ref, w1, w2, w3, w4, w5, b_ref, out_ref):
    """One batch tile of the full 5-layer MLP.  Weights are BN-folded, bf16,
    VMEM-resident; biases are packed as rows of b_ref (f32)."""
    H = w1.shape[1]   # padded hidden dim
    O = w5.shape[1]   # padded output dim

    def layer(h, w_ref, row, width, relu=True):
        # MXU matmul in bf16 with f32 accumulation.
        z = jnp.dot(h, w_ref[...], preferred_element_type=jnp.float32)
        # Folded (Linear + BN) bias; epilogue in f32.
        z = z + b_ref[row:row + 1, :width]
        if relu:
            # Carry inter-layer activations in bf16 (halves vreg/VMEM pressure).
            return jnp.maximum(z, 0.0).astype(jnp.bfloat16)
        return z  # final layer result stays f32 for the output store

    h = x_ref[...].astype(jnp.bfloat16)   # single input cast (no-op if x is bf16)
    h = layer(h, w1, 0, H)                # Linear+BN+ReLU   (Dropout(0.2) -> identity)
    h = layer(h, w2, 1, H)                # Linear+BN+ReLU   (Dropout(0.2) -> identity)
    h = layer(h, w3, 2, H)                # Linear+BN+ReLU
    h = layer(h, w4, 3, H)                # Linear+BN+ReLU   (Dropout(0.1) -> identity)
    out_ref[...] = layer(h, w5, 4, O, relu=False).astype(out_ref.dtype)


# --------------------------------------------------------------------- param prep
def prepare_params(params):
    """One-time preprocessing (hoisted out of the forward hot path):
    fold eval-mode BN into the Linears, pad feature dims to lane width, cast weights
    to bf16, and pack the 5 bias rows into one (8, d_max) f32 array."""
    input_dim, hidden_dim = params["w1"].shape
    output_dim = params["w5"].shape[1]

    in_pad = _round_up(input_dim, 128)
    hid_pad = _round_up(hidden_dim, 128)
    out_pad = _round_up(output_dim, 128)
    d_max = max(hid_pad, out_pad)

    dims_in = [in_pad, hid_pad, hid_pad, hid_pad, hid_pad]
    dims_out = [hid_pad, hid_pad, hid_pad, hid_pad, out_pad]

    weights = []
    bias_pack = jnp.zeros((8, d_max), jnp.float32)
    for i in range(1, 6):
        w = params[f"w{i}"]            # [in, out], f32
        b = params[f"b{i}"]            # [1, out],  f32
        if i <= 4:                     # fold BN (exact, in f32)
            s = params[f"g{i}"] * jax.lax.rsqrt(params[f"v{i}"] + BN_EPS)
            w = w * s
            b = (b - params[f"m{i}"]) * s + params[f"be{i}"]
        fan_in, fan_out = w.shape
        w = jnp.pad(w, ((0, dims_in[i - 1] - fan_in), (0, dims_out[i - 1] - fan_out)))
        weights.append(w.astype(jnp.bfloat16))
        bias_pack = bias_pack.at[i - 1, :fan_out].set(b[0])

    dims = dict(input_dim=input_dim, hidden_dim=hidden_dim, output_dim=output_dim,
                in_pad=in_pad, hid_pad=hid_pad, out_pad=out_pad, d_max=d_max)
    return {"weights": tuple(weights), "bias_pack": bias_pack, "dims": dims}


# ------------------------------------------------------------------------ wrapper
def qnetwork_forward(x, prepared, *, max_tile_b=512):
    dims = prepared["dims"]
    weights = prepared["weights"]
    bias_pack = prepared["bias_pack"]
    in_pad, hid_pad, out_pad, d_max = (dims["in_pad"], dims["hid_pad"],
                                       dims["out_pad"], dims["d_max"])
    input_dim, output_dim = dims["input_dim"], dims["output_dim"]

    assert x.shape[1] == input_dim, "x feature dim mismatch"
    if x.dtype not in (jnp.float32, jnp.bfloat16):
        x = x.astype(jnp.float32)
    batch = x.shape[0]

    # ---- VMEM budget & batch-tile selection (generation-aware) -------------------
    vmem_cap = _vmem_capacity_bytes()                      # 64 MiB (v7x) / 128 MiB (v5e/v6e)
    vmem_ceiling = max(min(vmem_cap - 16 * MiB, 100 * MiB), 32 * MiB)

    weight_bytes = sum(int(w.size) * 2 for w in weights)   # bf16, single copy
    bias_bytes = int(bias_pack.size) * 4
    x_itemsize = int(jnp.dtype(x.dtype).itemsize)
    # Per batch-row VMEM: double-buffered x & out tiles + bf16 activation slack.
    per_row = 2 * in_pad * x_itemsize + 2 * out_pad * 4 + 4 * hid_pad * 2

    rows_fit = int((vmem_ceiling - weight_bytes - bias_bytes - 4 * MiB) // per_row)
    tile_b = min(max_tile_b, max(rows_fit, 16))
    if tile_b >= 256:
        tile_b = (tile_b // 128) * 128                     # MXU-friendly multiple of 128
    if batch >= 256:
        # Keep >= 2 grid steps so v7x's two TensorCores both get batch tiles.
        tile_b = min(tile_b, max(_round_up(pl.cdiv(batch, 2), 128), 128))
    tile_b = min(tile_b, _round_up(batch, 16))             # don't exceed (padded) batch
    tile_b = _round_up(tile_b, 16)                         # bf16 packs two rows/sublane
    batch_pad = _round_up(batch, tile_b)
    grid = (batch_pad // tile_b,)

    # vmem_limit_bytes: actual need (conservatively assuming double-buffered weights,
    # so the no-Buffered fallback also fits) clamped to the generation-aware ceiling.
    need = 2 * (weight_bytes + bias_bytes) + tile_b * per_row + 4 * MiB
    vmem_limit = int(max(min(_round_up(need, MiB), vmem_ceiling), 32 * MiB))

    x_p = jnp.pad(x, ((0, batch_pad - batch), (0, in_pad - input_dim)))

    # Advisory cost estimate for XLA scheduling.
    flops = 2 * batch_pad * (in_pad * hid_pad + 3 * hid_pad * hid_pad + hid_pad * out_pad)
    bytes_accessed = (int(x_p.size) * x_itemsize + weight_bytes + bias_bytes
                      + batch_pad * out_pad * 4)

    def build_call(weight_buffering):
        if weight_buffering is None:
            def wspec(shape):
                return pl.BlockSpec(shape, lambda i: (0, 0))
        else:
            def wspec(shape):
                return pl.BlockSpec(shape, lambda i: (0, 0),
                                    pipeline_mode=weight_buffering)
        return pl.pallas_call(
            qnet_kernel,
            out_shape=jax.ShapeDtypeStruct((batch_pad, out_pad), jnp.float32),
            grid_spec=pltpu.PrefetchScalarGridSpec(
                num_scalar_prefetch=0,
                grid=grid,
                in_specs=[
                    pl.BlockSpec((tile_b, in_pad), lambda i: (i, 0)),  # x: batch-tiled
                    wspec((in_pad, hid_pad)),    # w1 (resident, constant index_map)
                    wspec((hid_pad, hid_pad)),   # w2
                    wspec((hid_pad, hid_pad)),   # w3
                    wspec((hid_pad, hid_pad)),   # w4
                    wspec((hid_pad, out_pad)),   # w5
                    wspec((8, d_max)),           # packed folded biases
                ],
                out_specs=pl.BlockSpec((tile_b, out_pad), lambda i: (i, 0)),
            ),
            compiler_params=pltpu.CompilerParams(
                dimension_semantics=("parallel",),   # megacore split over batch tiles
                vmem_limit_bytes=vmem_limit,
            ),
            cost_estimate=pl.CostEstimate(
                flops=flops, transcendentals=0, bytes_accessed=bytes_accessed),
        )

    try:
        # Constant-index weight blocks need no double buffer: halve their VMEM footprint.
        out_padded = build_call(pl.Buffered(1))(x_p, *weights, bias_pack)
    except Exception:
        # Fallback for Pallas versions without single-buffered pipeline_mode support.
        out_padded = build_call(None)(x_p, *weights, bias_pack)

    return out_padded[:batch, :output_dim]


# --------------------------------------------------------------------------- init
def init_params(key, input_dim, hidden_dim, output_dim):
    """Deterministic init mirroring PyTorch defaults (Linear: U(-1/sqrt(fan_in), ...);
    BatchNorm1d: gamma=1, beta=0, running_mean=0, running_var=1).
    Linear weights are stored pre-transposed as [in, out]."""
    dims = [(input_dim, hidden_dim), (hidden_dim, hidden_dim),
            (hidden_dim, hidden_dim), (hidden_dim, hidden_dim),
            (hidden_dim, output_dim)]
    params = {}
    for i, (fan_in, fan_out) in enumerate(dims, start=1):
        key, kw, kb = jax.random.split(key, 3)
        bound = 1.0 / jnp.sqrt(fan_in)
        params[f"w{i}"] = jax.random.uniform(
            kw, (fan_in, fan_out), jnp.float32, -bound, bound)
        params[f"b{i}"] = jax.random.uniform(
            kb, (1, fan_out), jnp.float32, -bound, bound)
        if i <= 4:  # BN follows the first four linears
            params[f"g{i}"] = jnp.ones((1, fan_out), jnp.float32)
            params[f"be{i}"] = jnp.zeros((1, fan_out), jnp.float32)
            params[f"m{i}"] = jnp.zeros((1, fan_out), jnp.float32)
            params[f"v{i}"] = jnp.ones((1, fan_out), jnp.float32)
    return params


def reference_forward(x, params):
    """Pure-JAX f32 reference of the same eval-mode forward (unfolded BN)."""
    h = x.astype(jnp.float32)
    for i in range(1, 5):
        z = h @ params[f"w{i}"] + params[f"b{i}"]
        z = (z - params[f"m{i}"]) * jax.lax.rsqrt(params[f"v{i}"] + BN_EPS) \
            * params[f"g{i}"] + params[f"be{i}"]
        h = jnp.maximum(z, 0.0)
    return h @ params["w5"] + params["b5"]


if __name__ == "__main__":
    batch, input_dim, hidden_dim, output_dim = 8, 16, 32, 4

    key = jax.random.PRNGKey(0)
    key, kx = jax.random.split(key)
    x = jax.random.normal(kx, (batch, input_dim), jnp.float32)
    params = init_params(key, input_dim, hidden_dim, output_dim)

    # One-time prep (BN folding, padding, bf16 cast) — outside the forward hot path.
    prepared = prepare_params(params)

    out = qnetwork_forward(x, prepared)
    out = jax.block_until_ready(out)

    ref = reference_forward(x, params)
    assert out.shape == (batch, output_dim)
    # bf16 MXU path vs pure-f32 reference -> relaxed tolerance.
    assert jnp.allclose(out, ref, atol=5e-2, rtol=5e-2), "mismatch vs JAX reference"

    print("KERNEL_OK")
</pallas_src>

<mosaic_0001>
module attributes {stable_mosaic.version = 11 : i64} {
  func.func @qnet_kernel(%arg0: i32, %arg1: memref<16x128xf32, #tpu.memory_space<vmem>>, %arg2: memref<128x128xbf16, #tpu.memory_space<vmem>>, %arg3: memref<128x128xbf16, #tpu.memory_space<vmem>>, %arg4: memref<128x128xbf16, #tpu.memory_space<vmem>>, %arg5: memref<128x128xbf16, #tpu.memory_space<vmem>>, %arg6: memref<128x128xbf16, #tpu.memory_space<vmem>>, %arg7: memref<8x128xf32, #tpu.memory_space<vmem>>, %arg8: memref<16x128xf32, #tpu.memory_space<vmem>>) attributes {dimension_semantics = [#tpu.dimension_semantics<parallel>], iteration_bounds = array<i64: 1>, scalar_prefetch = 0 : i64, scratch_operands = 0 : i64, tpu.core_type = #tpu.core_type<tc>, window_params = [{transform_indices = @transform_0, window_bounds = array<i64: 16, 128>}, {pipeline_mode = #tpu.pipeline_mode<synchronous>, transform_indices = @transform_1, window_bounds = array<i64: 128, 128>}, {pipeline_mode = #tpu.pipeline_mode<synchronous>, transform_indices = @transform_2, window_bounds = array<i64: 128, 128>}, {pipeline_mode = #tpu.pipeline_mode<synchronous>, transform_indices = @transform_3, window_bounds = array<i64: 128, 128>}, {pipeline_mode = #tpu.pipeline_mode<synchronous>, transform_indices = @transform_4, window_bounds = array<i64: 128, 128>}, {pipeline_mode = #tpu.pipeline_mode<synchronous>, transform_indices = @transform_5, window_bounds = array<i64: 128, 128>}, {pipeline_mode = #tpu.pipeline_mode<synchronous>, transform_indices = @transform_6, window_bounds = array<i64: 8, 128>}, {transform_indices = @transform_7, window_bounds = array<i64: 16, 128>}]} {
    %c0 = arith.constant 0 : index
    %c0_0 = arith.constant 0 : index
    %0 = vector.load %arg1[%c0, %c0_0] : memref<16x128xf32, #tpu.memory_space<vmem>>, vector<16x128xf32>
    %1 = arith.truncf %0 : vector<16x128xf32> to vector<16x128xbf16>
    %c0_1 = arith.constant 0 : index
    %c0_2 = arith.constant 0 : index
    %2 = vector.load %arg2[%c0_1, %c0_2] : memref<128x128xbf16, #tpu.memory_space<vmem>>, vector<128x128xbf16>
    %cst = arith.constant dense<0.000000e+00> : vector<16x128xf32>
    %3 = tpu.matmul %1, %2, %cst {dimension_numbers = #tpu.dot_dimension_numbers<[1], [0], [0], [1], [0, 0, 1, 1], [], []>} : vector<16x128xbf16>, vector<128x128xbf16>, vector<16x128xf32> -> vector<16x128xf32>
    %c0_3 = arith.constant 0 : index
    %c0_4 = arith.constant 0 : index
    %4 = vector.load %arg7[%c0_3, %c0_4] : memref<8x128xf32, #tpu.memory_space<vmem>>, vector<1x128xf32>
    %5 = vector.broadcast %4 : vector<1x128xf32> to vector<16x128xf32>
    %6 = arith.addf %3, %5 : vector<16x128xf32>
    %cst_5 = arith.constant 0.000000e+00 : f32
    %7 = vector.broadcast %cst_5 : f32 to vector<16x128xf32>
    %8 = arith.maximumf %6, %7 : vector<16x128xf32>
    %9 = arith.truncf %8 : vector<16x128xf32> to vector<16x128xbf16>
    %c0_6 = arith.constant 0 : index
    %c0_7 = arith.constant 0 : index
    %10 = vector.load %arg3[%c0_6, %c0_7] : memref<128x128xbf16, #tpu.memory_space<vmem>>, vector<128x128xbf16>
    %cst_8 = arith.constant dense<0.000000e+00> : vector<16x128xf32>
    %11 = tpu.matmul %9, %10, %cst_8 {dimension_numbers = #tpu.dot_dimension_numbers<[1], [0], [0], [1], [0, 0, 1, 1], [], []>} : vector<16x128xbf16>, vector<128x128xbf16>, vector<16x128xf32> -> vector<16x128xf32>
    %c1 = arith.constant 1 : index
    %c0_9 = arith.constant 0 : index
    %12 = vector.load %arg7[%c1, %c0_9] : memref<8x128xf32, #tpu.memory_space<vmem>>, vector<1x128xf32>
    %13 = vector.broadcast %12 : vector<1x128xf32> to vector<16x128xf32>
    %14 = arith.addf %11, %13 : vector<16x128xf32>
    %cst_10 = arith.constant 0.000000e+00 : f32
    %15 = vector.broadcast %cst_10 : f32 to vector<16x128xf32>
    %16 = arith.maximumf %14, %15 : vector<16x128xf32>
    %17 = arith.truncf %16 : vector<16x128xf32> to vector<16x128xbf16>
    %c0_11 = arith.constant 0 : index
    %c0_12 = arith.constant 0 : index
    %18 = vector.load %arg4[%c0_11, %c0_12] : memref<128x128xbf16, #tpu.memory_space<vmem>>, vector<128x128xbf16>
    %cst_13 = arith.constant dense<0.000000e+00> : vector<16x128xf32>
    %19 = tpu.matmul %17, %18, %cst_13 {dimension_numbers = #tpu.dot_dimension_numbers<[1], [0], [0], [1], [0, 0, 1, 1], [], []>} : vector<16x128xbf16>, vector<128x128xbf16>, vector<16x128xf32> -> vector<16x128xf32>
    %c2 = arith.constant 2 : index
    %c0_14 = arith.constant 0 : index
    %20 = vector.load %arg7[%c2, %c0_14] : memref<8x128xf32, #tpu.memory_space<vmem>>, vector<1x128xf32>
    %21 = vector.broadcast %20 : vector<1x128xf32> to vector<16x128xf32>
    %22 = arith.addf %19, %21 : vector<16x128xf32>
    %cst_15 = arith.constant 0.000000e+00 : f32
    %23 = vector.broadcast %cst_15 : f32 to vector<16x128xf32>
    %24 = arith.maximumf %22, %23 : vector<16x128xf32>
    %25 = arith.truncf %24 : vector<16x128xf32> to vector<16x128xbf16>
    %c0_16 = arith.constant 0 : index
    %c0_17 = arith.constant 0 : index
    %26 = vector.load %arg5[%c0_16, %c0_17] : memref<128x128xbf16, #tpu.memory_space<vmem>>, vector<128x128xbf16>
    %cst_18 = arith.constant dense<0.000000e+00> : vector<16x128xf32>
    %27 = tpu.matmul %25, %26, %cst_18 {dimension_numbers = #tpu.dot_dimension_numbers<[1], [0], [0], [1], [0, 0, 1, 1], [], []>} : vector<16x128xbf16>, vector<128x128xbf16>, vector<16x128xf32> -> vector<16x128xf32>
    %c3 = arith.constant 3 : index
    %c0_19 = arith.constant 0 : index
    %28 = vector.load %arg7[%c3, %c0_19] : memref<8x128xf32, #tpu.memory_space<vmem>>, vector<1x128xf32>
    %29 = vector.broadcast %28 : vector<1x128xf32> to vector<16x128xf32>
    %30 = arith.addf %27, %29 : vector<16x128xf32>
    %cst_20 = arith.constant 0.000000e+00 : f32
    %31 = vector.broadcast %cst_20 : f32 to vector<16x128xf32>
    %32 = arith.maximumf %30, %31 : vector<16x128xf32>
    %33 = arith.truncf %32 : vector<16x128xf32> to vector<16x128xbf16>
    %c0_21 = arith.constant 0 : index
    %c0_22 = arith.constant 0 : index
    %34 = vector.load %arg6[%c0_21, %c0_22] : memref<128x128xbf16, #tpu.memory_space<vmem>>, vector<128x128xbf16>
    %cst_23 = arith.constant dense<0.000000e+00> : vector<16x128xf32>
    %35 = tpu.matmul %33, %34, %cst_23 {dimension_numbers = #tpu.dot_dimension_numbers<[1], [0], [0], [1], [0, 0, 1, 1], [], []>} : vector<16x128xbf16>, vector<128x128xbf16>, vector<16x128xf32> -> vector<16x128xf32>
    %c4 = arith.constant 4 : index
    %c0_24 = arith.constant 0 : index
    %36 = vector.load %arg7[%c4, %c0_24] : memref<8x128xf32, #tpu.memory_space<vmem>>, vector<1x128xf32>
    %37 = vector.broadcast %36 : vector<1x128xf32> to vector<16x128xf32>
    %38 = arith.addf %35, %37 : vector<16x128xf32>
    %c0_25 = arith.constant 0 : index
    %c0_26 = arith.constant 0 : index
    %39 = vector.load %arg8[%c0_25, %c0_26] : memref<16x128xf32, #tpu.memory_space<vmem>>, vector<16x128xf32>
    tpu.vector_store %arg8[%c0_25, %c0_26], %38 {strides = array<i32>} : memref<16x128xf32, #tpu.memory_space<vmem>>, vector<16x128xf32>,
    return
  }
  func.func @transform_0(%arg0: i32) -> (i32, i32) {
    %c0_i32 = arith.constant 0 : i32
    %c0_i32_0 = arith.constant 0 : i32
    return %arg0, %c0_i32 : i32, i32
  }
  func.func @transform_1(%arg0: i32) -> (i32, i32) {
    %c0_i32 = arith.constant 0 : i32
    %c0_i32_0 = arith.constant 0 : i32
    %c0_i32_1 = arith.constant 0 : i32
    return %c0_i32, %c0_i32_0 : i32, i32
  }
  func.func @transform_2(%arg0: i32) -> (i32, i32) {
    %c0_i32 = arith.constant 0 : i32
    %c0_i32_0 = arith.constant 0 : i32
    %c0_i32_1 = arith.constant 0 : i32
    return %c0_i32, %c0_i32_0 : i32, i32
  }
  func.func @transform_3(%arg0: i32) -> (i32, i32) {
    %c0_i32 = arith.constant 0 : i32
    %c0_i32_0 = arith.constant 0 : i32
    %c0_i32_1 = arith.constant 0 : i32
    return %c0_i32, %c0_i32_0 : i32, i32
  }
  func.func @transform_4(%arg0: i32) -> (i32, i32) {
    %c0_i32 = arith.constant 0 : i32
    %c0_i32_0 = arith.constant 0 : i32
    %c0_i32_1 = arith.constant 0 : i32
    return %c0_i32, %c0_i32_0 : i32, i32
  }
  func.func @transform_5(%arg0: i32) -> (i32, i32) {
    %c0_i32 = arith.constant 0 : i32
    %c0_i32_0 = arith.constant 0 : i32
    %c0_i32_1 = arith.constant 0 : i32
    return %c0_i32, %c0_i32_0 : i32, i32
  }
  func.func @transform_6(%arg0: i32) -> (i32, i32) {
    %c0_i32 = arith.constant 0 : i32
    %c0_i32_0 = arith.constant 0 : i32
    %c0_i32_1 = arith.constant 0 : i32
    return %c0_i32, %c0_i32_0 : i32, i32
  }
  func.func @transform_7(%arg0: i32) -> (i32, i32) {
    %c0_i32 = arith.constant 0 : i32
    %c0_i32_0 = arith.constant 0 : i32
    return %arg0, %c0_i32 : i32, i32
  }
}

module attributes {stable_mosaic.version = 11 : i64} {
  func.func @qnet_kernel(%arg0: i32, %arg1: memref<16x128xf32, #tpu.memory_space<vmem>>, %arg2: memref<128x128xbf16, #tpu.memory_space<vmem>>, %arg3: memref<128x128xbf16, #tpu.memory_space<vmem>>, %arg4: memref<128x128xbf16, #tpu.memory_space<vmem>>, %arg5: memref<128x128xbf16, #tpu.memory_space<vmem>>, %arg6: memref<128x128xbf16, #tpu.memory_space<vmem>>, %arg7: memref<8x128xf32, #tpu.memory_space<vmem>>, %arg8: memref<16x128xf32, #tpu.memory_space<vmem>>) attributes {dimension_semantics = [#tpu.dimension_semantics<parallel>], iteration_bounds = array<i64: 1>, scalar_prefetch = 0 : i64, scratch_operands = 0 : i64, tpu.core_type = #tpu.core_type<tc>, window_params = [{transform_indices = @transform_0, window_bounds = array<i64: 16, 128>}, {pipeline_mode = #tpu.pipeline_mode<synchronous>, transform_indices = @transform_1, window_bounds = array<i64: 128, 128>}, {pipeline_mode = #tpu.pipeline_mode<synchronous>, transform_indices = @transform_2, window_bounds = array<i64: 128, 128>}, {pipeline_mode = #tpu.pipeline_mode<synchronous>, transform_indices = @transform_3, window_bounds = array<i64: 128, 128>}, {pipeline_mode = #tpu.pipeline_mode<synchronous>, transform_indices = @transform_4, window_bounds = array<i64: 128, 128>}, {pipeline_mode = #tpu.pipeline_mode<synchronous>, transform_indices = @transform_5, window_bounds = array<i64: 128, 128>}, {pipeline_mode = #tpu.pipeline_mode<synchronous>, transform_indices = @transform_6, window_bounds = array<i64: 8, 128>}, {transform_indices = @transform_7, window_bounds = array<i64: 16, 128>}]} {
    %c0 = arith.constant 0 : index
    %c0_0 = arith.constant 0 : index
    %0 = vector.load %arg1[%c0, %c0_0] : memref<16x128xf32, #tpu.memory_space<vmem>>, vector<16x128xf32>
    %1 = arith.truncf %0 : vector<16x128xf32> to vector<16x128xbf16>
    %c0_1 = arith.constant 0 : index
    %c0_2 = arith.constant 0 : index
    %2 = vector.load %arg2[%c0_1, %c0_2] : memref<128x128xbf16, #tpu.memory_space<vmem>>, vector<128x128xbf16>
    %cst = arith.constant dense<0.000000e+00> : vector<16x128xf32>
    %3 = tpu.matmul %1, %2, %cst {dimension_numbers = #tpu.dot_dimension_numbers<[1], [0], [0], [1], [0, 0, 1, 1], [], []>} : vector<16x128xbf16>, vector<128x128xbf16>, vector<16x128xf32> -> vector<16x128xf32>
    %c0_3 = arith.constant 0 : index
    %c0_4 = arith.constant 0 : index
    %4 = vector.load %arg7[%c0_3, %c0_4] : memref<8x128xf32, #tpu.memory_space<vmem>>, vector<1x128xf32>
    %5 = vector.broadcast %4 : vector<1x128xf32> to vector<16x128xf32>
    %6 = arith.addf %3, %5 : vector<16x128xf32>
    %cst_5 = arith.constant 0.000000e+00 : f32
    %7 = vector.broadcast %cst_5 : f32 to vector<16x128xf32>
    %8 = arith.maximumf %6, %7 : vector<16x128xf32>
    %9 = arith.truncf %8 : vector<16x128xf32> to vector<16x128xbf16>
    %c0_6 = arith.constant 0 : index
    %c0_7 = arith.constant 0 : index
    %10 = vector.load %arg3[%c0_6, %c0_7] : memref<128x128xbf16, #tpu.memory_space<vmem>>, vector<128x128xbf16>
    %cst_8 = arith.constant dense<0.000000e+00> : vector<16x128xf32>
    %11 = tpu.matmul %9, %10, %cst_8 {dimension_numbers = #tpu.dot_dimension_numbers<[1], [0], [0], [1], [0, 0, 1, 1], [], []>} : vector<16x128xbf16>, vector<128x128xbf16>, vector<16x128xf32> -> vector<16x128xf32>
    %c1 = arith.constant 1 : index
    %c0_9 = arith.constant 0 : index
    %12 = vector.load %arg7[%c1, %c0_9] : memref<8x128xf32, #tpu.memory_space<vmem>>, vector<1x128xf32>
    %13 = vector.broadcast %12 : vector<1x128xf32> to vector<16x128xf32>
    %14 = arith.addf %11, %13 : vector<16x128xf32>
    %cst_10 = arith.constant 0.000000e+00 : f32
    %15 = vector.broadcast %cst_10 : f32 to vector<16x128xf32>
    %16 = arith.maximumf %14, %15 : vector<16x128xf32>
    %17 = arith.truncf %16 : vector<16x128xf32> to vector<16x128xbf16>
    %c0_11 = arith.constant 0 : index
    %c0_12 = arith.constant 0 : index
    %18 = vector.load %arg4[%c0_11, %c0_12] : memref<128x128xbf16, #tpu.memory_space<vmem>>, vector<128x128xbf16>
    %cst_13 = arith.constant dense<0.000000e+00> : vector<16x128xf32>
    %19 = tpu.matmul %17, %18, %cst_13 {dimension_numbers = #tpu.dot_dimension_numbers<[1], [0], [0], [1], [0, 0, 1, 1], [], []>} : vector<16x128xbf16>, vector<128x128xbf16>, vector<16x128xf32> -> vector<16x128xf32>
    %c2 = arith.constant 2 : index
    %c0_14 = arith.constant 0 : index
    %20 = vector.load %arg7[%c2, %c0_14] : memref<8x128xf32, #tpu.memory_space<vmem>>, vector<1x128xf32>
    %21 = vector.broadcast %20 : vector<1x128xf32> to vector<16x128xf32>
    %22 = arith.addf %19, %21 : vector<16x128xf32>
    %cst_15 = arith.constant 0.000000e+00 : f32
    %23 = vector.broadcast %cst_15 : f32 to vector<16x128xf32>
    %24 = arith.maximumf %22, %23 : vector<16x128xf32>
    %25 = arith.truncf %24 : vector<16x128xf32> to vector<16x128xbf16>
    %c0_16 = arith.constant 0 : index
    %c0_17 = arith.constant 0 : index
    %26 = vector.load %arg5[%c0_16, %c0_17] : memref<128x128xbf16, #tpu.memory_space<vmem>>, vector<128x128xbf16>
    %cst_18 = arith.constant dense<0.000000e+00> : vector<16x128xf32>
    %27 = tpu.matmul %25, %26, %cst_18 {dimension_numbers = #tpu.dot_dimension_numbers<[1], [0], [0], [1], [0, 0, 1, 1], [], []>} : vector<16x128xbf16>, vector<128x128xbf16>, vector<16x128xf32> -> vector<16x128xf32>
    %c3 = arith.constant 3 : index
    %c0_19 = arith.constant 0 : index
    %28 = vector.load %arg7[%c3, %c0_19] : memref<8x128xf32, #tpu.memory_space<vmem>>, vector<1x128xf32>
    %29 = vector.broadcast %28 : vector<1x128xf32> to vector<16x128xf32>
    %30 = arith.addf %27, %29 : vector<16x128xf32>
    %cst_20 = arith.constant 0.000000e+00 : f32
    %31 = vector.broadcast %cst_20 : f32 to vector<16x128xf32>
    %32 = arith.maximumf %30, %31 : vector<16x128xf32>
    %33 = arith.truncf %32 : vector<16x128xf32> to vector<16x128xbf16>
    %c0_21 = arith.constant 0 : index
    %c0_22 = arith.constant 0 : index
    %34 = vector.load %arg6[%c0_21, %c0_22] : memref<128x128xbf16, #tpu.memory_space<vmem>>, vector<128x128xbf16>
    %cst_23 = arith.constant dense<0.000000e+00> : vector<16x128xf32>
    %35 = tpu.matmul %33, %34, %cst_23 {dimension_numbers = #tpu.dot_dimension_numbers<[1], [0], [0], [1], [0, 0, 1, 1], [], []>} : vector<16x128xbf16>, vector<128x128xbf16>, vector<16x128xf32> -> vector<16x128xf32>
    %c4 = arith.constant 4 : index
    %c0_24 = arith.constant 0 : index
    %36 = vector.load %arg7[%c4, %c0_24] : memref<8x128xf32, #tpu.memory_space<vmem>>, vector<1x128xf32>
    %37 = vector.broadcast %36 : vector<1x128xf32> to vector<16x128xf32>
    %38 = arith.addf %35, %37 : vector<16x128xf32>
    %c0_25 = arith.constant 0 : index
    %c0_26 = arith.constant 0 : index
    %39 = vector.load %arg8[%c0_25, %c0_26] : memref<16x128xf32, #tpu.memory_space<vmem>>, vector<16x128xf32>
    tpu.vector_store %arg8[%c0_25, %c0_26], %38 {strides = array<i32>} : memref<16x128xf32, #tpu.memory_space<vmem>>, vector<16x128xf32>,
    return
  }
  func.func @transform_0(%arg0: i32) -> (i32, i32) {
    %c0_i32 = arith.constant 0 : i32
    %c0_i32_0 = arith.constant 0 : i32
    return %arg0, %c0_i32 : i32, i32
  }
  func.func @transform_1(%arg0: i32) -> (i32, i32) {
    %c0_i32 = arith.constant 0 : i32
    %c0_i32_0 = arith.constant 0 : i32
    %c0_i32_1 = arith.constant 0 : i32
    return %c0_i32, %c0_i32_0 : i32, i32
  }
  func.func @transform_2(%arg0: i32) -> (i32, i32) {
    %c0_i32 = arith.constant 0 : i32
    %c0_i32_0 = arith.constant 0 : i32
    %c0_i32_1 = arith.constant 0 : i32
    return %c0_i32, %c0_i32_0 : i32, i32
  }
  func.func @transform_3(%arg0: i32) -> (i32, i32) {
    %c0_i32 = arith.constant 0 : i32
    %c0_i32_0 = arith.constant 0 : i32
    %c0_i32_1 = arith.constant 0 : i32
    return %c0_i32, %c0_i32_0 : i32, i32
  }
  func.func @transform_4(%arg0: i32) -> (i32, i32) {
    %c0_i32 = arith.constant 0 : i32
    %c0_i32_0 = arith.constant 0 : i32
    %c0_i32_1 = arith.constant 0 : i32
    return %c0_i32, %c0_i32_0 : i32, i32
  }
  func.func @transform_5(%arg0: i32) -> (i32, i32) {
    %c0_i32 = arith.constant 0 : i32
    %c0_i32_0 = arith.constant 0 : i32
    %c0_i32_1 = arith.constant 0 : i32
    return %c0_i32, %c0_i32_0 : i32, i32
  }
  func.func @transform_6(%arg0: i32) -> (i32, i32) {
    %c0_i32 = arith.constant 0 : i32
    %c0_i32_0 = arith.constant 0 : i32
    %c0_i32_1 = arith.constant 0 : i32
    return %c0_i32, %c0_i32_0 : i32, i32
  }
  func.func @transform_7(%arg0: i32) -> (i32, i32) {
    %c0_i32 = arith.constant 0 : i32
    %c0_i32_0 = arith.constant 0 : i32
    return %arg0, %c0_i32 : i32, i32
  }
}

</mosaic_0001>

<llo_original>
// kernel: tpu_custom_call.1
$region0: #{tpu_custom_call.1}
  #allocation0 [shape = 'u32[]', space=smem, size = 0x4, offset = 0x4, fixed_abs, tag = 'smem constant byte address 0x4 - core index']
  #allocation1 [shape = 'u32[144,128]{1,0:T(1,128)}', space=vmem, size = 0x12000, scoped, tag = 'internal scratch']
  %s0 = inlined_call_operand.hbm [shape: f32[16,128], index: 0, kind: input, shape index: {}]
  %s1 = inlined_call_operand.hbm [shape: bf16[128,128], index: 1, kind: input, shape index: {}]
  %s2 = inlined_call_operand.hbm [shape: bf16[128,128], index: 2, kind: input, shape index: {}]
  %s3 = inlined_call_operand.hbm [shape: bf16[128,128], index: 3, kind: input, shape index: {}]
  %s4 = inlined_call_operand.hbm [shape: bf16[128,128], index: 4, kind: input, shape index: {}]
  %s5 = inlined_call_operand.hbm [shape: bf16[128,128], index: 5, kind: input, shape index: {}]
  %s6 = inlined_call_operand.vmem [shape: f32[8,128], index: 6, kind: input, shape index: {}]
  %s7 = inlined_call_operand.hbm [shape: f32[16,128], index: 7, kind: output, shape index: {}]
  %s8 = sld [smem:[#allocation0]]
  $region62: #{tpu_custom_call.1} parent=0
    _
  %s10 = ssub.s32 1, %s8
  %s11 = scalar_select 0, %s10, %s8
  $region1: #{tpu_custom_call.1} parent=0
    #allocation2 [shape = 'u8[8192]{0}', space=vmem, size = 0x2000, scoped, tag = 'input window, operand 0, single buffered']
    #allocation3 [shape = 's32[1]{0}', space=sflag, size = 0x4, scoped, tag = 'scoped memory for tpu_custom_call.1']
    #allocation4 [shape = 's32[1]{0}', space=sflag, size = 0x4, scoped, tag = 'scoped memory for tpu_custom_call.1']
    #allocation5 [shape = 'u8[32768]{0}', space=vmem, size = 0x8000, scoped, tag = 'input window, operand 1, single buffered']
    #allocation6 [shape = 's32[1]{0}', space=sflag, size = 0x4, scoped, tag = 'scoped memory for tpu_custom_call.1']
    #allocation7 [shape = 'u8[32768]{0}', space=vmem, size = 0x8000, scoped, tag = 'input window, operand 2, single buffered']
    #allocation8 [shape = 'u8[32768]{0}', space=vmem, size = 0x8000, scoped, tag = 'input window, operand 3, single buffered']
    #allocation9 [shape = 's32[1]{0}', space=sflag, size = 0x4, scoped, tag = 'scoped memory for tpu_custom_call.1']
    #allocation10 [shape = 'u8[32768]{0}', space=vmem, size = 0x8000, scoped, tag = 'input window, operand 4, single buffered']
    #allocation11 [shape = 'u8[32768]{0}', space=vmem, size = 0x8000, scoped, tag = 'input window, operand 5, single buffered']
    #allocation12 [shape = 's32[1]{0}', space=sflag, size = 0x4, scoped, tag = 'scoped memory for tpu_custom_call.1']
    #allocation13 [shape = 'u8[8192]{0}', space=vmem, size = 0x2000, scoped, tag = 'output window, operand 0, single buffered']
    %12 = vsyncpa [#allocation3], 0
    %13 = vsyncpa [#allocation6], 0
    %14 = vsyncpa [#allocation9], 0
    %15 = vsyncpa [#allocation12], 0
    %16 = vsyncpa [#allocation4], 0
    // Predicated region
    $region2: #{tpu_custom_call.1} parent=1 // pred_check
      _
    $region3: #{tpu_custom_call.1} parent=1 // pred_check_branch
      %18 = sbr.rel (0) target = $region5
    $region4: #{tpu_custom_call.1} parent=1 // pred_region
      %s20 = ssub.s32 256, 256
      %21 = vsyncadd [#allocation3], %s20
      %s22 = sshll.u32 [#allocation2], 4
      %s23 = int_to_ptr.vmem [resolvable:$true] %s22
      %28 = dma.hbm_to_vmem [thread:$0]  %s0, 256, %s23, [#allocation3], 128, 128, 8
    $region5: #{tpu_custom_call.1} parent=1 // pred_fallthru
      _
    // Predicated region
    $region6: #{tpu_custom_call.1} parent=1 // pred_check
      _
    $region7: #{tpu_custom_call.1} parent=1 // pred_check_branch
      %30 = sbr.rel (0) target = $region9
    $region8: #{tpu_custom_call.1} parent=1 // pred_region
      %s32 = ssub.s32 1024, 1024
      %33 = vsyncadd [#allocation6], %s32
      %s34 = sshll.u32 [#allocation5], 4
      %s35 = int_to_ptr.vmem [resolvable:$true] %s34
      %40 = dma.hbm_to_vmem [thread:$0]  %s1, 1024, %s35, [#allocation6], 64, 64, 4
    $region9: #{tpu_custom_call.1} parent=1 // pred_fallthru
      _
    // Predicated region
    $region10: #{tpu_custom_call.1} parent=1 // pred_check
      _
    $region11: #{tpu_custom_call.1} parent=1 // pred_check_branch
      %42 = sbr.rel (0) target = $region13
    $region12: #{tpu_custom_call.1} parent=1 // pred_region
      %s44 = ssub.s32 1024, 1024
      %45 = vsyncadd [#allocation6], %s44
      %s46 = sshll.u32 [#allocation7], 4
      %s47 = int_to_ptr.vmem [resolvable:$true] %s46
      %52 = dma.hbm_to_vmem [thread:$0]  %s2, 1024, %s47, [#allocation6], 64, 64, 4
    $region13: #{tpu_custom_call.1} parent=1 // pred_fallthru
      _
    // Predicated region
    $region14: #{tpu_custom_call.1} parent=1 // pred_check
      _
    $region15: #{tpu_custom_call.1} parent=1 // pred_check_branch
      %54 = sbr.rel (0) target = $region17
    $region16: #{tpu_custom_call.1} parent=1 // pred_region
      %s56 = ssub.s32 1024, 1024
      %57 = vsyncadd [#allocation9], %s56
      %s58 = sshll.u32 [#allocation8], 4
      %s59 = int_to_ptr.vmem [resolvable:$true] %s58
      %64 = dma.hbm_to_vmem [thread:$0]  %s3, 1024, %s59, [#allocation9], 64, 64, 4
    $region17: #{tpu_custom_call.1} parent=1 // pred_fallthru
      _
    // Predicated region
    $region18: #{tpu_custom_call.1} parent=1 // pred_check
      _
    $region19: #{tpu_custom_call.1} parent=1 // pred_check_branch
      %66 = sbr.rel (0) target = $region21
    $region20: #{tpu_custom_call.1} parent=1 // pred_region
      %s68 = ssub.s32 1024, 1024
      %69 = vsyncadd [#allocation9], %s68
      %s70 = sshll.u32 [#allocation10], 4
      %s71 = int_to_ptr.vmem [resolvable:$true] %s70
      %76 = dma.hbm_to_vmem [thread:$0]  %s4, 1024, %s71, [#allocation9], 64, 64, 4
    $region21: #{tpu_custom_call.1} parent=1 // pred_fallthru
      _
    // Predicated region
    $region22: #{tpu_custom_call.1} parent=1 // pred_check
      _
    $region23: #{tpu_custom_call.1} parent=1 // pred_check_branch
      %78 = sbr.rel (0) target = $region25
    $region24: #{tpu_custom_call.1} parent=1 // pred_region
      %s80 = ssub.s32 1024, 1024
      %81 = vsyncadd [#allocation12], %s80
      %s82 = sshll.u32 [#allocation11], 4
      %s83 = int_to_ptr.vmem [resolvable:$true] %s82
      %88 = dma.hbm_to_vmem [thread:$0]  %s5, 1024, %s83, [#allocation12], 64, 64, 4
    $region25: #{tpu_custom_call.1} parent=1 // pred_fallthru
      _
    // Predicated region
    $region26: #{tpu_custom_call.1} parent=1 // pred_check
      _
    $region27: #{tpu_custom_call.1} parent=1 // pred_check_branch
      %90 = sbr.rel (0) target = $region29
    $region28: #{tpu_custom_call.1} parent=1 // pred_region
      _
    $region29: #{tpu_custom_call.1} parent=1 // pred_fallthru
      _
    // Predicated region
    $region30: #{tpu_custom_call.1} parent=1 // pred_check
      _
    $region31: #{tpu_custom_call.1} parent=1 // pred_check_branch
      %92 = sbr.rel (0) target = $region33
    $region32: #{tpu_custom_call.1} parent=1 // pred_region
      %93 = dma.done [#allocation3], 256
    $region33: #{tpu_custom_call.1} parent=1 // pred_fallthru
      _
    // Predicated region
    $region34: #{tpu_custom_call.1} parent=1 // pred_check
      _
    $region35: #{tpu_custom_call.1} parent=1 // pred_check_branch
      %95 = sbr.rel (0) target = $region37
    $region36: #{tpu_custom_call.1} parent=1 // pred_region
      %96 = dma.done [#allocation6], 1024
    $region37: #{tpu_custom_call.1} parent=1 // pred_fallthru
      _
    // Predicated region
    $region38: #{tpu_custom_call.1} parent=1 // pred_check
      _
    $region39: #{tpu_custom_call.1} parent=1 // pred_check_branch
      %98 = sbr.rel (0) target = $region41
    $region40: #{tpu_custom_call.1} parent=1 // pred_region
      %99 = dma.done [#allocation6], 1024
    $region41: #{tpu_custom_call.1} parent=1 // pred_fallthru
      _
    // Predicated region
    $region42: #{tpu_custom_call.1} parent=1 // pred_check
      _
    $region43: #{tpu_custom_call.1} parent=1 // pred_check_branch
      %101 = sbr.rel (0) target = $region45
    $region44: #{tpu_custom_call.1} parent=1 // pred_region
      %102 = dma.done [#allocation9], 1024
    $region45: #{tpu_custom_call.1} parent=1 // pred_fallthru
      _
    // Predicated region
    $region46: #{tpu_custom_call.1} parent=1 // pred_check
      _
    $region47: #{tpu_custom_call.1} parent=1 // pred_check_branch
      %104 = sbr.rel (0) target = $region49
    $region48: #{tpu_custom_call.1} parent=1 // pred_region
      %105 = dma.done [#allocation9], 1024
    $region49: #{tpu_custom_call.1} parent=1 // pred_fallthru
      _
    // Predicated region
    $region50: #{tpu_custom_call.1} parent=1 // pred_check
      _
    $region51: #{tpu_custom_call.1} parent=1 // pred_check_branch
      %107 = sbr.rel (0) target = $region53
    $region52: #{tpu_custom_call.1} parent=1 // pred_region
      %108 = dma.done [#allocation12], 1024
    $region53: #{tpu_custom_call.1} parent=1 // pred_fallthru
      _
    %v110 = vld [vmem:[#allocation2] sm:$0xff]
    %v111 = vld [vmem:[#allocation2 + $0x8] sm:$0xff]
    %v112 = vpack.c.bf16 %v111, %v110
    %v113 = vld [vmem:[#allocation5] sm:$0xf]
    %v114 = vld [vmem:[#allocation5 + $0x4] sm:$0xf]
    %v115 = vld [vmem:[#allocation5 + $0x8] sm:$0xf]
    %v116 = vld [vmem:[#allocation5 + $0xc] sm:$0xf]
    %v117 = vld [vmem:[#allocation5 + $0x10] sm:$0xf]
    %v118 = vld [vmem:[#allocation5 + $0x14] sm:$0xf]
    %v119 = vld [vmem:[#allocation5 + $0x18] sm:$0xf]
    %v120 = vld [vmem:[#allocation5 + $0x1c] sm:$0xf]
    %v121 = vld [vmem:[#allocation5 + $0x20] sm:$0xf]
    %v122 = vld [vmem:[#allocation5 + $0x24] sm:$0xf]
    %v123 = vld [vmem:[#allocation5 + $0x28] sm:$0xf]
    %v124 = vld [vmem:[#allocation5 + $0x2c] sm:$0xf]
    %v125 = vld [vmem:[#allocation5 + $0x30] sm:$0xf]
    %v126 = vld [vmem:[#allocation5 + $0x34] sm:$0xf]
    %v127 = vld [vmem:[#allocation5 + $0x38] sm:$0xf]
    %v128 = vld [vmem:[#allocation5 + $0x3c] sm:$0xf]
    %v129 = vld [vmem:[%s6] sm:$0x1]
    %v130 = vlaneseq
    %v131 = vshrl.u32 %v130, 7
    %v132 = vsub.s32 0, %v131
    %v133 = vrot.slane %v129, %v132
    %v150 = vunpack.c.l.b16 %v113
    %v151 = vunpack.c.l.b16 %v114
    %v152 = vunpack.c.l.b16 %v115
    %v153 = vunpack.c.l.b16 %v116
    %v154 = vunpack.c.l.b16 %v117
    %v155 = vunpack.c.l.b16 %v118
    %v156 = vunpack.c.l.b16 %v119
    %v157 = vunpack.c.l.b16 %v120
    %v158 = vunpack.c.l.b16 %v121
    %v159 = vunpack.c.l.b16 %v122
    %v160 = vunpack.c.l.b16 %v123
    %v161 = vunpack.c.l.b16 %v124
    %v162 = vunpack.c.l.b16 %v125
    %v163 = vunpack.c.l.b16 %v126
    %v164 = vunpack.c.l.b16 %v127
    %v165 = vunpack.c.l.b16 %v128
    %v166 = vpack.c.b16 %v151, %v150
    %v167 = vpack.c.b16 %v153, %v152
    %v168 = vpack.c.b16 %v155, %v154
    %v169 = vpack.c.b16 %v157, %v156
    %v170 = vpack.c.b16 %v159, %v158
    %v171 = vpack.c.b16 %v161, %v160
    %v172 = vpack.c.b16 %v163, %v162
    %v173 = vpack.c.b16 %v165, %v164
    %182 = vmatprep.subr.bf16.mxu0 0
    %183 = vmatpush1.bf16.msra.mxu0 %v166
    %184 = vmatprep.subr.bf16.mxu0 0
    %185 = vmatpush1.bf16.msra.mxu0 %v167
    %186 = vmatprep.subr.bf16.mxu0 0
    %187 = vmatpush1.bf16.msra.mxu0 %v168
    %188 = vmatprep.subr.bf16.mxu0 0
    %189 = vmatpush1.bf16.msra.mxu0 %v169
    %190 = vmatprep.subr.bf16.mxu0 0
    %191 = vmatpush1.bf16.msra.mxu0 %v170
    %192 = vmatprep.subr.bf16.mxu0 0
    %193 = vmatpush1.bf16.msra.mxu0 %v171
    %194 = vmatprep.subr.bf16.mxu0 0
    %195 = vmatpush1.bf16.msra.mxu0 %v172
    %196 = vmatprep.subr.bf16.mxu0 0
    %197 = vmatpush1.bf16.msra.mxu0 %v173
    %198 = vmatprep.subr.bf16.mxu0 0
    %199 = vmatpush1.bf16.msra.mxu0 0
    %200 = vmatprep.subr.bf16.mxu0 0
    %201 = vmatpush1.bf16.msra.mxu0 0
    %202 = vmatprep.subr.bf16.mxu0 0
    %203 = vmatpush1.bf16.msra.mxu0 0
    %204 = vmatprep.subr.bf16.mxu0 0
    %205 = vmatpush1.bf16.msra.mxu0 0
    %206 = vmatprep.subr.bf16.mxu0 0
    %207 = vmatpush1.bf16.msra.mxu0 0
    %208 = vmatprep.subr.bf16.mxu0 0
    %209 = vmatpush1.bf16.msra.mxu0 0
    %210 = vmatprep.subr.bf16.mxu0 0
    %211 = vmatpush1.bf16.msra.mxu0 0
    %212 = vmatprep.subr.bf16.mxu0 0
    %213 = vmatpush1.bf16.msra.mxu0 0
    %214 = vmatprep.mubr.bf16.mxu0 0
    %215 = vmatmul.mubr.bf16.gmra.mrb[0].mxu0 %v112
    %v216 = vpop.f32.mrb[0].mxu0
    %v217 = vadd.f32 %v133, %v216
    %v218 = vpop.f32.mrb[0].mxu0
    %v219 = vpop.f32.mrb[0].mxu0
    %v220 = vadd.f32 %v133, %v219
    %v221 = vpop.f32.mrb[0].mxu0
    %222 = vdwg.mxu0
    %v223 = vmax.f32 %v217, 0.0
    %v224 = vmax.f32 %v220, 0.0
    %v225 = vpack.c.bf16 %v224, %v223
    %v226 = vld [vmem:[#allocation7] sm:$0xf]
    %v227 = vld [vmem:[#allocation7 + $0x4] sm:$0xf]
    %v228 = vld [vmem:[#allocation7 + $0x8] sm:$0xf]
    %v229 = vld [vmem:[#allocation7 + $0xc] sm:$0xf]
    %v230 = vld [vmem:[#allocation7 + $0x10] sm:$0xf]
    %v231 = vld [vmem:[#allocation7 + $0x14] sm:$0xf]
    %v232 = vld [vmem:[#allocation7 + $0x18] sm:$0xf]
    %v233 = vld [vmem:[#allocation7 + $0x1c] sm:$0xf]
    %v234 = vld [vmem:[#allocation7 + $0x20] sm:$0xf]
    %v235 = vld [vmem:[#allocation7 + $0x24] sm:$0xf]
    %v236 = vld [vmem:[#allocation7 + $0x28] sm:$0xf]
    %v237 = vld [vmem:[#allocation7 + $0x2c] sm:$0xf]
    %v238 = vld [vmem:[#allocation7 + $0x30] sm:$0xf]
    %v239 = vld [vmem:[#allocation7 + $0x34] sm:$0xf]
    %v240 = vld [vmem:[#allocation7 + $0x38] sm:$0xf]
    %v241 = vld [vmem:[#allocation7 + $0x3c] sm:$0xf]
    %v242 = vld [vmem:[%s6 + $0x1] sm:$0x1]
    %v243 = vlaneseq
    %v244 = vshrl.u32 %v243, 7
    %v245 = vsub.s32 0, %v244
    %v246 = vrot.slane %v242, %v245
    %v263 = vunpack.c.l.b16 %v226
    %v264 = vunpack.c.l.b16 %v227
    %v265 = vunpack.c.l.b16 %v228
    %v266 = vunpack.c.l.b16 %v229
    %v267 = vunpack.c.l.b16 %v230
    %v268 = vunpack.c.l.b16 %v231
    %v269 = vunpack.c.l.b16 %v232
    %v270 = vunpack.c.l.b16 %v233
    %v271 = vunpack.c.l.b16 %v234
    %v272 = vunpack.c.l.b16 %v235
    %v273 = vunpack.c.l.b16 %v236
    %v274 = vunpack.c.l.b16 %v237
    %v275 = vunpack.c.l.b16 %v238
    %v276 = vunpack.c.l.b16 %v239
    %v277 = vunpack.c.l.b16 %v240
    %v278 = vunpack.c.l.b16 %v241
    %v279 = vpack.c.b16 %v264, %v263
    %v280 = vpack.c.b16 %v266, %v265
    %v281 = vpack.c.b16 %v268, %v267
    %v282 = vpack.c.b16 %v270, %v269
    %v283 = vpack.c.b16 %v272, %v271
    %v284 = vpack.c.b16 %v274, %v273
    %v285 = vpack.c.b16 %v276, %v275
    %v286 = vpack.c.b16 %v278, %v277
    %295 = vmatprep.subr.bf16.mxu0 0
    %296 = vmatpush1.bf16.msra.mxu0 %v279
    %297 = vmatprep.subr.bf16.mxu0 0
    %298 = vmatpush1.bf16.msra.mxu0 %v280
    %299 = vmatprep.subr.bf16.mxu0 0
    %300 = vmatpush1.bf16.msra.mxu0 %v281
    %301 = vmatprep.subr.bf16.mxu0 0
    %302 = vmatpush1.bf16.msra.mxu0 %v282
    %303 = vmatprep.subr.bf16.mxu0 0
    %304 = vmatpush1.bf16.msra.mxu0 %v283
    %305 = vmatprep.subr.bf16.mxu0 0
    %306 = vmatpush1.bf16.msra.mxu0 %v284
    %307 = vmatprep.subr.bf16.mxu0 0
    %308 = vmatpush1.bf16.msra.mxu0 %v285
    %309 = vmatprep.subr.bf16.mxu0 0
    %310 = vmatpush1.bf16.msra.mxu0 %v286
    %311 = vmatprep.subr.bf16.mxu0 0
    %312 = vmatpush1.bf16.msra.mxu0 0
    %313 = vmatprep.subr.bf16.mxu0 0
    %314 = vmatpush1.bf16.msra.mxu0 0
    %315 = vmatprep.subr.bf16.mxu0 0
    %316 = vmatpush1.bf16.msra.mxu0 0
    %317 = vmatprep.subr.bf16.mxu0 0
    %318 = vmatpush1.bf16.msra.mxu0 0
    %319 = vmatprep.subr.bf16.mxu0 0
    %320 = vmatpush1.bf16.msra.mxu0 0
    %321 = vmatprep.subr.bf16.mxu0 0
    %322 = vmatpush1.bf16.msra.mxu0 0
    %323 = vmatprep.subr.bf16.mxu0 0
    %324 = vmatpush1.bf16.msra.mxu0 0
    %325 = vmatprep.subr.bf16.mxu0 0
    %326 = vmatpush1.bf16.msra.mxu0 0
    %327 = vmatprep.mubr.bf16.mxu0 0
    %328 = vmatmul.mubr.bf16.gmra.mrb[0].mxu0 %v225
    %v329 = vpop.f32.mrb[0].mxu0
    %v330 = vadd.f32 %v246, %v329
    %v331 = vpop.f32.mrb[0].mxu0
    %v332 = vpop.f32.mrb[0].mxu0
    %v333 = vadd.f32 %v246, %v332
    %v334 = vpop.f32.mrb[0].mxu0
    %335 = vdwg.mxu0
    %v336 = vmax.f32 %v330, 0.0
    %v337 = vmax.f32 %v333, 0.0
    %v338 = vpack.c.bf16 %v337, %v336
    %v339 = vld [vmem:[#allocation8] sm:$0xf]
    %v340 = vld [vmem:[#allocation8 + $0x4] sm:$0xf]
    %v341 = vld [vmem:[#allocation8 + $0x8] sm:$0xf]
    %v342 = vld [vmem:[#allocation8 + $0xc] sm:$0xf]
    %v343 = vld [vmem:[#allocation8 + $0x10] sm:$0xf]
    %v344 = vld [vmem:[#allocation8 + $0x14] sm:$0xf]
    %v345 = vld [vmem:[#allocation8 + $0x18] sm:$0xf]
    %v346 = vld [vmem:[#allocation8 + $0x1c] sm:$0xf]
    %v347 = vld [vmem:[#allocation8 + $0x20] sm:$0xf]
    %v348 = vld [vmem:[#allocation8 + $0x24] sm:$0xf]
    %v349 = vld [vmem:[#allocation8 + $0x28] sm:$0xf]
    %v350 = vld [vmem:[#allocation8 + $0x2c] sm:$0xf]
    %v351 = vld [vmem:[#allocation8 + $0x30] sm:$0xf]
    %v352 = vld [vmem:[#allocation8 + $0x34] sm:$0xf]
    %v353 = vld [vmem:[#allocation8 + $0x38] sm:$0xf]
    %v354 = vld [vmem:[#allocation8 + $0x3c] sm:$0xf]
    %v355 = vld [vmem:[%s6 + $0x2] sm:$0x1]
    %v356 = vlaneseq
    %v357 = vshrl.u32 %v356, 7
    %v358 = vsub.s32 0, %v357
    %v359 = vrot.slane %v355, %v358
    %v376 = vunpack.c.l.b16 %v339
    %v377 = vunpack.c.l.b16 %v340
    %v378 = vunpack.c.l.b16 %v341
    %v379 = vunpack.c.l.b16 %v342
    %v380 = vunpack.c.l.b16 %v343
    %v381 = vunpack.c.l.b16 %v344
    %v382 = vunpack.c.l.b16 %v345
    %v383 = vunpack.c.l.b16 %v346
    %v384 = vunpack.c.l.b16 %v347
    %v385 = vunpack.c.l.b16 %v348
    %v386 = vunpack.c.l.b16 %v349
    %v387 = vunpack.c.l.b16 %v350
    %v388 = vunpack.c.l.b16 %v351
    %v389 = vunpack.c.l.b16 %v352
    %v390 = vunpack.c.l.b16 %v353
    %v391 = vunpack.c.l.b16 %v354
    %v392 = vpack.c.b16 %v377, %v376
    %v393 = vpack.c.b16 %v379, %v378
    %v394 = vpack.c.b16 %v381, %v380
    %v395 = vpack.c.b16 %v383, %v382
    %v396 = vpack.c.b16 %v385, %v384
    %v397 = vpack.c.b16 %v387, %v386
    %v398 = vpack.c.b16 %v389, %v388
    %v399 = vpack.c.b16 %v391, %v390
    %408 = vmatprep.subr.bf16.mxu0 0
    %409 = vmatpush1.bf16.msra.mxu0 %v392
    %410 = vmatprep.subr.bf16.mxu0 0
    %411 = vmatpush1.bf16.msra.mxu0 %v393
    %412 = vmatprep.subr.bf16.mxu0 0
    %413 = vmatpush1.bf16.msra.mxu0 %v394
    %414 = vmatprep.subr.bf16.mxu0 0
    %415 = vmatpush1.bf16.msra.mxu0 %v395
    %416 = vmatprep.subr.bf16.mxu0 0
    %417 = vmatpush1.bf16.msra.mxu0 %v396
    %418 = vmatprep.subr.bf16.mxu0 0
    %419 = vmatpush1.bf16.msra.mxu0 %v397
    %420 = vmatprep.subr.bf16.mxu0 0
    %421 = vmatpush1.bf16.msra.mxu0 %v398
    %422 = vmatprep.subr.bf16.mxu0 0
    %423 = vmatpush1.bf16.msra.mxu0 %v399
    %424 = vmatprep.subr.bf16.mxu0 0
    %425 = vmatpush1.bf16.msra.mxu0 0
    %426 = vmatprep.subr.bf16.mxu0 0
    %427 = vmatpush1.bf16.msra.mxu0 0
    %428 = vmatprep.subr.bf16.mxu0 0
    %429 = vmatpush1.bf16.msra.mxu0 0
    %430 = vmatprep.subr.bf16.mxu0 0
    %431 = vmatpush1.bf16.msra.mxu0 0
    %432 = vmatprep.subr.bf16.mxu0 0
    %433 = vmatpush1.bf16.msra.mxu0 0
    %434 = vmatprep.subr.bf16.mxu0 0
    %435 = vmatpush1.bf16.msra.mxu0 0
    %436 = vmatprep.subr.bf16.mxu0 0
    %437 = vmatpush1.bf16.msra.mxu0 0
    %438 = vmatprep.subr.bf16.mxu0 0
    %439 = vmatpush1.bf16.msra.mxu0 0
    %440 = vmatprep.mubr.bf16.mxu0 0
    %441 = vmatmul.mubr.bf16.gmra.mrb[0].mxu0 %v338
    %v442 = vpop.f32.mrb[0].mxu0
    %v443 = vadd.f32 %v359, %v442
    %v444 = vpop.f32.mrb[0].mxu0
    %v445 = vpop.f32.mrb[0].mxu0
    %v446 = vadd.f32 %v359, %v445
    %v447 = vpop.f32.mrb[0].mxu0
    %448 = vdwg.mxu0
    %v449 = vmax.f32 %v443, 0.0
    %v450 = vmax.f32 %v446, 0.0
    %v451 = vpack.c.bf16 %v450, %v449
    %v452 = vld [vmem:[#allocation10] sm:$0xf]
    %v453 = vld [vmem:[#allocation10 + $0x4] sm:$0xf]
    %v454 = vld [vmem:[#allocation10 + $0x8] sm:$0xf]
    %v455 = vld [vmem:[#allocation10 + $0xc] sm:$0xf]
    %v456 = vld [vmem:[#allocation10 + $0x10] sm:$0xf]
    %v457 = vld [vmem:[#allocation10 + $0x14] sm:$0xf]
    %v458 = vld [vmem:[#allocation10 + $0x18] sm:$0xf]
    %v459 = vld [vmem:[#allocation10 + $0x1c] sm:$0xf]
    %v460 = vld [vmem:[#allocation10 + $0x20] sm:$0xf]
    %v461 = vld [vmem:[#allocation10 + $0x24] sm:$0xf]
    %v462 = vld [vmem:[#allocation10 + $0x28] sm:$0xf]
    %v463 = vld [vmem:[#allocation10 + $0x2c] sm:$0xf]
    %v464 = vld [vmem:[#allocation10 + $0x30] sm:$0xf]
    %v465 = vld [vmem:[#allocation10 + $0x34] sm:$0xf]
    %v466 = vld [vmem:[#allocation10 + $0x38] sm:$0xf]
    %v467 = vld [vmem:[#allocation10 + $0x3c] sm:$0xf]
    %v468 = vld [vmem:[%s6 + $0x3] sm:$0x1]
    %v469 = vlaneseq
    %v470 = vshrl.u32 %v469, 7
    %v471 = vsub.s32 0, %v470
    %v472 = vrot.slane %v468, %v471
    %v489 = vunpack.c.l.b16 %v452
    %v490 = vunpack.c.l.b16 %v453
    %v491 = vunpack.c.l.b16 %v454
    %v492 = vunpack.c.l.b16 %v455
    %v493 = vunpack.c.l.b16 %v456
    %v494 = vunpack.c.l.b16 %v457
    %v495 = vunpack.c.l.b16 %v458
    %v496 = vunpack.c.l.b16 %v459
    %v497 = vunpack.c.l.b16 %v460
    %v498 = vunpack.c.l.b16 %v461
    %v499 = vunpack.c.l.b16 %v462
    %v500 = vunpack.c.l.b16 %v463
    %v501 = vunpack.c.l.b16 %v464
    %v502 = vunpack.c.l.b16 %v465
    %v503 = vunpack.c.l.b16 %v466
    %v504 = vunpack.c.l.b16 %v467
    %v505 = vpack.c.b16 %v490, %v489
    %v506 = vpack.c.b16 %v492, %v491
    %v507 = vpack.c.b16 %v494, %v493
    %v508 = vpack.c.b16 %v496, %v495
    %v509 = vpack.c.b16 %v498, %v497
    %v510 = vpack.c.b16 %v500, %v499
    %v511 = vpack.c.b16 %v502, %v501
    %v512 = vpack.c.b16 %v504, %v503
    %521 = vmatprep.subr.bf16.mxu0 0
    %522 = vmatpush1.bf16.msra.mxu0 %v505
    %523 = vmatprep.subr.bf16.mxu0 0
    %524 = vmatpush1.bf16.msra.mxu0 %v506
    %525 = vmatprep.subr.bf16.mxu0 0
    %526 = vmatpush1.bf16.msra.mxu0 %v507
    %527 = vmatprep.subr.bf16.mxu0 0
    %528 = vmatpush1.bf16.msra.mxu0 %v508
    %529 = vmatprep.subr.bf16.mxu0 0
    %530 = vmatpush1.bf16.msra.mxu0 %v509
    %531 = vmatprep.subr.bf16.mxu0 0
    %532 = vmatpush1.bf16.msra.mxu0 %v510
    %533 = vmatprep.subr.bf16.mxu0 0
    %534 = vmatpush1.bf16.msra.mxu0 %v511
    %535 = vmatprep.subr.bf16.mxu0 0
    %536 = vmatpush1.bf16.msra.mxu0 %v512
    %537 = vmatprep.subr.bf16.mxu0 0
    %538 = vmatpush1.bf16.msra.mxu0 0
    %539 = vmatprep.subr.bf16.mxu0 0
    %540 = vmatpush1.bf16.msra.mxu0 0
    %541 = vmatprep.subr.bf16.mxu0 0
    %542 = vmatpush1.bf16.msra.mxu0 0
    %543 = vmatprep.subr.bf16.mxu0 0
    %544 = vmatpush1.bf16.msra.mxu0 0
    %545 = vmatprep.subr.bf16.mxu0 0
    %546 = vmatpush1.bf16.msra.mxu0 0
    %547 = vmatprep.subr.bf16.mxu0 0
    %548 = vmatpush1.bf16.msra.mxu0 0
    %549 = vmatprep.subr.bf16.mxu0 0
    %550 = vmatpush1.bf16.msra.mxu0 0
    %551 = vmatprep.subr.bf16.mxu0 0
    %552 = vmatpush1.bf16.msra.mxu0 0
    %553 = vmatprep.mubr.bf16.mxu0 0
    %554 = vmatmul.mubr.bf16.gmra.mrb[0].mxu0 %v451
    %v555 = vpop.f32.mrb[0].mxu0
    %v556 = vadd.f32 %v472, %v555
    %v557 = vpop.f32.mrb[0].mxu0
    %v558 = vpop.f32.mrb[0].mxu0
    %v559 = vadd.f32 %v472, %v558
    %v560 = vpop.f32.mrb[0].mxu0
    %561 = vdwg.mxu0
    %v562 = vmax.f32 %v556, 0.0
    %v563 = vmax.f32 %v559, 0.0
    %v564 = vpack.c.bf16 %v563, %v562
    %v565 = vld [vmem:[#allocation11] sm:$0xf]
    %v566 = vld [vmem:[#allocation11 + $0x4] sm:$0xf]
    %v567 = vld [vmem:[#allocation11 + $0x8] sm:$0xf]
    %v568 = vld [vmem:[#allocation11 + $0xc] sm:$0xf]
    %v569 = vld [vmem:[#allocation11 + $0x10] sm:$0xf]
    %v570 = vld [vmem:[#allocation11 + $0x14] sm:$0xf]
    %v571 = vld [vmem:[#allocation11 + $0x18] sm:$0xf]
    %v572 = vld [vmem:[#allocation11 + $0x1c] sm:$0xf]
    %v573 = vld [vmem:[#allocation11 + $0x20] sm:$0xf]
    %v574 = vld [vmem:[#allocation11 + $0x24] sm:$0xf]
    %v575 = vld [vmem:[#allocation11 + $0x28] sm:$0xf]
    %v576 = vld [vmem:[#allocation11 + $0x2c] sm:$0xf]
    %v577 = vld [vmem:[#allocation11 + $0x30] sm:$0xf]
    %v578 = vld [vmem:[#allocation11 + $0x34] sm:$0xf]
    %v579 = vld [vmem:[#allocation11 + $0x38] sm:$0xf]
    %v580 = vld [vmem:[#allocation11 + $0x3c] sm:$0xf]
    %v581 = vld [vmem:[%s6 + $0x4] sm:$0x1]
    %v582 = vlaneseq
    %v583 = vshrl.u32 %v582, 7
    %v584 = vsub.s32 0, %v583
    %v585 = vrot.slane %v581, %v584
    %v602 = vunpack.c.l.b16 %v565
    %v603 = vunpack.c.l.b16 %v566
    %v604 = vunpack.c.l.b16 %v567
    %v605 = vunpack.c.l.b16 %v568
    %v606 = vunpack.c.l.b16 %v569
    %v607 = vunpack.c.l.b16 %v570
    %v608 = vunpack.c.l.b16 %v571
    %v609 = vunpack.c.l.b16 %v572
    %v610 = vunpack.c.l.b16 %v573
    %v611 = vunpack.c.l.b16 %v574
    %v612 = vunpack.c.l.b16 %v575
    %v613 = vunpack.c.l.b16 %v576
    %v614 = vunpack.c.l.b16 %v577
    %v615 = vunpack.c.l.b16 %v578
    %v616 = vunpack.c.l.b16 %v579
    %v617 = vunpack.c.l.b16 %v580
    %v618 = vpack.c.b16 %v603, %v602
    %v619 = vpack.c.b16 %v605, %v604
    %v620 = vpack.c.b16 %v607, %v606
    %v621 = vpack.c.b16 %v609, %v608
    %v622 = vpack.c.b16 %v611, %v610
    %v623 = vpack.c.b16 %v613, %v612
    %v624 = vpack.c.b16 %v615, %v614
    %v625 = vpack.c.b16 %v617, %v616
    %634 = vmatprep.subr.bf16.mxu0 0
    %635 = vmatpush1.bf16.msra.mxu0 %v618
    %636 = vmatprep.subr.bf16.mxu0 0
    %637 = vmatpush1.bf16.msra.mxu0 %v619
    %638 = vmatprep.subr.bf16.mxu0 0
    %639 = vmatpush1.bf16.msra.mxu0 %v620
    %640 = vmatprep.subr.bf16.mxu0 0
    %641 = vmatpush1.bf16.msra.mxu0 %v621
    %642 = vmatprep.subr.bf16.mxu0 0
    %643 = vmatpush1.bf16.msra.mxu0 %v622
    %644 = vmatprep.subr.bf16.mxu0 0
    %645 = vmatpush1.bf16.msra.mxu0 %v623
    %646 = vmatprep.subr.bf16.mxu0 0
    %647 = vmatpush1.bf16.msra.mxu0 %v624
    %648 = vmatprep.subr.bf16.mxu0 0
    %649 = vmatpush1.bf16.msra.mxu0 %v625
    %650 = vmatprep.subr.bf16.mxu0 0
    %651 = vmatpush1.bf16.msra.mxu0 0
    %652 = vmatprep.subr.bf16.mxu0 0
    %653 = vmatpush1.bf16.msra.mxu0 0
    %654 = vmatprep.subr.bf16.mxu0 0
    %655 = vmatpush1.bf16.msra.mxu0 0
    %656 = vmatprep.subr.bf16.mxu0 0
    %657 = vmatpush1.bf16.msra.mxu0 0
    %658 = vmatprep.subr.bf16.mxu0 0
    %659 = vmatpush1.bf16.msra.mxu0 0
    %660 = vmatprep.subr.bf16.mxu0 0
    %661 = vmatpush1.bf16.msra.mxu0 0
    %662 = vmatprep.subr.bf16.mxu0 0
    %663 = vmatpush1.bf16.msra.mxu0 0
    %664 = vmatprep.subr.bf16.mxu0 0
    %665 = vmatpush1.bf16.msra.mxu0 0
    %666 = vmatprep.mubr.bf16.mxu0 0
    %667 = vmatmul.mubr.bf16.gmra.mrb[0].mxu0 %v564
    %v668 = vpop.f32.mrb[0].mxu0
    %v669 = vadd.f32 %v585, %v668
    %v670 = vpop.f32.mrb[0].mxu0
    %v671 = vpop.f32.mrb[0].mxu0
    %v672 = vadd.f32 %v585, %v671
    %v673 = vpop.f32.mrb[0].mxu0
    %674 = vdwg.mxu0
    %675 = vst [vmem:[#allocation13] sm:$0xff] %v669
    %676 = vst [vmem:[#allocation13 + $0x8] sm:$0xff] %v672
    // Predicated region
    $region54: #{tpu_custom_call.1} parent=1 // pred_check
      _
    $region55: #{tpu_custom_call.1} parent=1 // pred_check_branch
      %678 = sbr.rel (0) target = $region57
    $region56: #{tpu_custom_call.1} parent=1 // pred_region
      %s680 = ssub.s32 256, 256
      %681 = vsyncadd [#allocation4], %s680
      %s682 = sshll.u32 [#allocation13], 4
      %s683 = int_to_ptr.vmem [resolvable:$true] %s682
      %688 = dma.vmem_to_hbm [thread:$0]  %s683, 256, %s7, [#allocation4], 128, 128, 8
    $region57: #{tpu_custom_call.1} parent=1 // pred_fallthru
      _
    // Predicated region
    $region58: #{tpu_custom_call.1} parent=1 // pred_check
      _
    $region59: #{tpu_custom_call.1} parent=1 // pred_check_branch
      %690 = sbr.rel (0) target = $region61
    $region60: #{tpu_custom_call.1} parent=1 // pred_region
      %691 = dma.done [#allocation4], 256
    $region61: #{tpu_custom_call.1} parent=1 // pred_fallthru
      _
    %692 = vsyncpa [#allocation3], 1
    %693 = vsyncpa [#allocation6], 1
    %694 = vsyncpa [#allocation9], 1
    %695 = vsyncpa [#allocation12], 1
    %696 = vsyncpa [#allocation4], 1

// kernel: tpu_custom_call.1
$region0: #{tpu_custom_call.1}
  #allocation0 [shape = 'u32[]', space=smem, size = 0x4, offset = 0x4, fixed_abs, tag = 'smem constant byte address 0x4 - core index']
  #allocation1 [shape = 'u32[144,128]{1,0:T(1,128)}', space=vmem, size = 0x12000, scoped, tag = 'internal scratch']
  %s0 = inlined_call_operand.hbm [shape: f32[16,128], index: 0, kind: input, shape index: {}]
  %s1 = inlined_call_operand.hbm [shape: bf16[128,128], index: 1, kind: input, shape index: {}]
  %s2 = inlined_call_operand.hbm [shape: bf16[128,128], index: 2, kind: input, shape index: {}]
  %s3 = inlined_call_operand.hbm [shape: bf16[128,128], index: 3, kind: input, shape index: {}]
  %s4 = inlined_call_operand.hbm [shape: bf16[128,128], index: 4, kind: input, shape index: {}]
  %s5 = inlined_call_operand.hbm [shape: bf16[128,128], index: 5, kind: input, shape index: {}]
  %s6 = inlined_call_operand.vmem [shape: f32[8,128], index: 6, kind: input, shape index: {}]
  %s7 = inlined_call_operand.hbm [shape: f32[16,128], index: 7, kind: output, shape index: {}]
  %s8 = sld [smem:[#allocation0]]
  $region62: #{tpu_custom_call.1} parent=0
    _
  %s10 = ssub.s32 1, %s8
  %s11 = scalar_select 0, %s10, %s8
  $region1: #{tpu_custom_call.1} parent=0
    #allocation2 [shape = 'u8[8192]{0}', space=vmem, size = 0x2000, scoped, tag = 'input window, operand 0, single buffered']
    #allocation3 [shape = 's32[1]{0}', space=sflag, size = 0x4, scoped, tag = 'scoped memory for tpu_custom_call.1']
    #allocation4 [shape = 's32[1]{0}', space=sflag, size = 0x4, scoped, tag = 'scoped memory for tpu_custom_call.1']
    #allocation5 [shape = 'u8[32768]{0}', space=vmem, size = 0x8000, scoped, tag = 'input window, operand 1, single buffered']
    #allocation6 [shape = 's32[1]{0}', space=sflag, size = 0x4, scoped, tag = 'scoped memory for tpu_custom_call.1']
    #allocation7 [shape = 'u8[32768]{0}', space=vmem, size = 0x8000, scoped, tag = 'input window, operand 2, single buffered']
    #allocation8 [shape = 'u8[32768]{0}', space=vmem, size = 0x8000, scoped, tag = 'input window, operand 3, single buffered']
    #allocation9 [shape = 's32[1]{0}', space=sflag, size = 0x4, scoped, tag = 'scoped memory for tpu_custom_call.1']
    #allocation10 [shape = 'u8[32768]{0}', space=vmem, size = 0x8000, scoped, tag = 'input window, operand 4, single buffered']
    #allocation11 [shape = 'u8[32768]{0}', space=vmem, size = 0x8000, scoped, tag = 'input window, operand 5, single buffered']
    #allocation12 [shape = 's32[1]{0}', space=sflag, size = 0x4, scoped, tag = 'scoped memory for tpu_custom_call.1']
    #allocation13 [shape = 'u8[8192]{0}', space=vmem, size = 0x2000, scoped, tag = 'output window, operand 0, single buffered']
    %12 = vsyncpa [#allocation3], 0
    %13 = vsyncpa [#allocation6], 0
    %14 = vsyncpa [#allocation9], 0
    %15 = vsyncpa [#allocation12], 0
    %16 = vsyncpa [#allocation4], 0
    // Predicated region
    $region2: #{tpu_custom_call.1} parent=1 // pred_check
      _
    $region3: #{tpu_custom_call.1} parent=1 // pred_check_branch
      %18 = sbr.rel (0) target = $region5
    $region4: #{tpu_custom_call.1} parent=1 // pred_region
      %s20 = ssub.s32 256, 256
      %21 = vsyncadd [#allocation3], %s20
      %s22 = sshll.u32 [#allocation2], 4
      %s23 = int_to_ptr.vmem [resolvable:$true] %s22
      %28 = dma.hbm_to_vmem [thread:$0]  %s0, 256, %s23, [#allocation3], 128, 128, 8
    $region5: #{tpu_custom_call.1} parent=1 // pred_fallthru
      _
    // Predicated region
    $region6: #{tpu_custom_call.1} parent=1 // pred_check
      _
    $region7: #{tpu_custom_call.1} parent=1 // pred_check_branch
      %30 = sbr.rel (0) target = $region9
    $region8: #{tpu_custom_call.1} parent=1 // pred_region
      %s32 = ssub.s32 1024, 1024
      %33 = vsyncadd [#allocation6], %s32
      %s34 = sshll.u32 [#allocation5], 4
      %s35 = int_to_ptr.vmem [resolvable:$true] %s34
      %40 = dma.hbm_to_vmem [thread:$0]  %s1, 1024, %s35, [#allocation6], 64, 64, 4
    $region9: #{tpu_custom_call.1} parent=1 // pred_fallthru
      _
    // Predicated region
    $region10: #{tpu_custom_call.1} parent=1 // pred_check
      _
    $region11: #{tpu_custom_call.1} parent=1 // pred_check_branch
      %42 = sbr.rel (0) target = $region13
    $region12: #{tpu_custom_call.1} parent=1 // pred_region
      %s44 = ssub.s32 1024, 1024
      %45 = vsyncadd [#allocation6], %s44
      %s46 = sshll.u32 [#allocation7], 4
      %s47 = int_to_ptr.vmem [resolvable:$true] %s46
      %52 = dma.hbm_to_vmem [thread:$0]  %s2, 1024, %s47, [#allocation6], 64, 64, 4
    $region13: #{tpu_custom_call.1} parent=1 // pred_fallthru
      _
    // Predicated region
    $region14: #{tpu_custom_call.1} parent=1 // pred_check
      _
    $region15: #{tpu_custom_call.1} parent=1 // pred_check_branch
      %54 = sbr.rel (0) target = $region17
    $region16: #{tpu_custom_call.1} parent=1 // pred_region
      %s56 = ssub.s32 1024, 1024
      %57 = vsyncadd [#allocation9], %s56
      %s58 = sshll.u32 [#allocation8], 4
      %s59 = int_to_ptr.vmem [resolvable:$true] %s58
      %64 = dma.hbm_to_vmem [thread:$0]  %s3, 1024, %s59, [#allocation9], 64, 64, 4
    $region17: #{tpu_custom_call.1} parent=1 // pred_fallthru
      _
    // Predicated region
    $region18: #{tpu_custom_call.1} parent=1 // pred_check
      _
    $region19: #{tpu_custom_call.1} parent=1 // pred_check_branch
      %66 = sbr.rel (0) target = $region21
    $region20: #{tpu_custom_call.1} parent=1 // pred_region
      %s68 = ssub.s32 1024, 1024
      %69 = vsyncadd [#allocation9], %s68
      %s70 = sshll.u32 [#allocation10], 4
      %s71 = int_to_ptr.vmem [resolvable:$true] %s70
      %76 = dma.hbm_to_vmem [thread:$0]  %s4, 1024, %s71, [#allocation9], 64, 64, 4
    $region21: #{tpu_custom_call.1} parent=1 // pred_fallthru
      _
    // Predicated region
    $region22: #{tpu_custom_call.1} parent=1 // pred_check
      _
    $region23: #{tpu_custom_call.1} parent=1 // pred_check_branch
      %78 = sbr.rel (0) target = $region25
    $region24: #{tpu_custom_call.1} parent=1 // pred_region
      %s80 = ssub.s32 1024, 1024
      %81 = vsyncadd [#allocation12], %s80
      %s82 = sshll.u32 [#allocation11], 4
      %s83 = int_to_ptr.vmem [resolvable:$true] %s82
      %88 = dma.hbm_to_vmem [thread:$0]  %s5, 1024, %s83, [#allocation12], 64, 64, 4
    $region25: #{tpu_custom_call.1} parent=1 // pred_fallthru
      _
    // Predicated region
    $region26: #{tpu_custom_call.1} parent=1 // pred_check
      _
    $region27: #{tpu_custom_call.1} parent=1 // pred_check_branch
      %90 = sbr.rel (0) target = $region29
    $region28: #{tpu_custom_call.1} parent=1 // pred_region
      _
    $region29: #{tpu_custom_call.1} parent=1 // pred_fallthru
      _
    // Predicated region
    $region30: #{tpu_custom_call.1} parent=1 // pred_check
      _
    $region31: #{tpu_custom_call.1} parent=1 // pred_check_branch
      %92 = sbr.rel (0) target = $region33
    $region32: #{tpu_custom_call.1} parent=1 // pred_region
      %93 = dma.done [#allocation3], 256
    $region33: #{tpu_custom_call.1} parent=1 // pred_fallthru
      _
    // Predicated region
    $region34: #{tpu_custom_call.1} parent=1 // pred_check
      _
    $region35: #{tpu_custom_call.1} parent=1 // pred_check_branch
      %95 = sbr.rel (0) target = $region37
    $region36: #{tpu_custom_call.1} parent=1 // pred_region
      %96 = dma.done [#allocation6], 1024
    $region37: #{tpu_custom_call.1} parent=1 // pred_fallthru
      _
    // Predicated region
    $region38: #{tpu_custom_call.1} parent=1 // pred_check
      _
    $region39: #{tpu_custom_call.1} parent=1 // pred_check_branch
      %98 = sbr.rel (0) target = $region41
    $region40: #{tpu_custom_call.1} parent=1 // pred_region
      %99 = dma.done [#allocation6], 1024
    $region41: #{tpu_custom_call.1} parent=1 // pred_fallthru
      _
    // Predicated region
    $region42: #{tpu_custom_call.1} parent=1 // pred_check
      _
    $region43: #{tpu_custom_call.1} parent=1 // pred_check_branch
      %101 = sbr.rel (0) target = $region45
    $region44: #{tpu_custom_call.1} parent=1 // pred_region
      %102 = dma.done [#allocation9], 1024
    $region45: #{tpu_custom_call.1} parent=1 // pred_fallthru
      _
    // Predicated region
    $region46: #{tpu_custom_call.1} parent=1 // pred_check
      _
    $region47: #{tpu_custom_call.1} parent=1 // pred_check_branch
      %104 = sbr.rel (0) target = $region49
    $region48: #{tpu_custom_call.1} parent=1 // pred_region
      %105 = dma.done [#allocation9], 1024
    $region49: #{tpu_custom_call.1} parent=1 // pred_fallthru
      _
    // Predicated region
    $region50: #{tpu_custom_call.1} parent=1 // pred_check
      _
    $region51: #{tpu_custom_call.1} parent=1 // pred_check_branch
      %107 = sbr.rel (0) target = $region53
    $region52: #{tpu_custom_call.1} parent=1 // pred_region
      %108 = dma.done [#allocation12], 1024
    $region53: #{tpu_custom_call.1} parent=1 // pred_fallthru
      _
    %v110 = vld [vmem:[#allocation2] sm:$0xff]
    %v111 = vld [vmem:[#allocation2 + $0x8] sm:$0xff]
    %v112 = vpack.c.bf16 %v111, %v110
    %v113 = vld [vmem:[#allocation5] sm:$0xf]
    %v114 = vld [vmem:[#allocation5 + $0x4] sm:$0xf]
    %v115 = vld [vmem:[#allocation5 + $0x8] sm:$0xf]
    %v116 = vld [vmem:[#allocation5 + $0xc] sm:$0xf]
    %v117 = vld [vmem:[#allocation5 + $0x10] sm:$0xf]
    %v118 = vld [vmem:[#allocation5 + $0x14] sm:$0xf]
    %v119 = vld [vmem:[#allocation5 + $0x18] sm:$0xf]
    %v120 = vld [vmem:[#allocation5 + $0x1c] sm:$0xf]
    %v121 = vld [vmem:[#allocation5 + $0x20] sm:$0xf]
    %v122 = vld [vmem:[#allocation5 + $0x24] sm:$0xf]
    %v123 = vld [vmem:[#allocation5 + $0x28] sm:$0xf]
    %v124 = vld [vmem:[#allocation5 + $0x2c] sm:$0xf]
    %v125 = vld [vmem:[#allocation5 + $0x30] sm:$0xf]
    %v126 = vld [vmem:[#allocation5 + $0x34] sm:$0xf]
    %v127 = vld [vmem:[#allocation5 + $0x38] sm:$0xf]
    %v128 = vld [vmem:[#allocation5 + $0x3c] sm:$0xf]
    %v129 = vld [vmem:[%s6] sm:$0x1]
    %v130 = vlaneseq
    %v131 = vshrl.u32 %v130, 7
    %v132 = vsub.s32 0, %v131
    %v133 = vrot.slane %v129, %v132
    %v150 = vunpack.c.l.b16 %v113
    %v151 = vunpack.c.l.b16 %v114
    %v152 = vunpack.c.l.b16 %v115
    %v153 = vunpack.c.l.b16 %v116
    %v154 = vunpack.c.l.b16 %v117
    %v155 = vunpack.c.l.b16 %v118
    %v156 = vunpack.c.l.b16 %v119
    %v157 = vunpack.c.l.b16 %v120
    %v158 = vunpack.c.l.b16 %v121
    %v159 = vunpack.c.l.b16 %v122
    %v160 = vunpack.c.l.b16 %v123
    %v161 = vunpack.c.l.b16 %v124
    %v162 = vunpack.c.l.b16 %v125
    %v163 = vunpack.c.l.b16 %v126
    %v164 = vunpack.c.l.b16 %v127
    %v165 = vunpack.c.l.b16 %v128
    %v166 = vpack.c.b16 %v151, %v150
    %v167 = vpack.c.b16 %v153, %v152
    %v168 = vpack.c.b16 %v155, %v154
    %v169 = vpack.c.b16 %v157, %v156
    %v170 = vpack.c.b16 %v159, %v158
    %v171 = vpack.c.b16 %v161, %v160
    %v172 = vpack.c.b16 %v163, %v162
    %v173 = vpack.c.b16 %v165, %v164
    %182 = vmatprep.subr.bf16.mxu0 0
    %183 = vmatpush1.bf16.msra.mxu0 %v166
    %184 = vmatprep.subr.bf16.mxu0 0
    %185 = vmatpush1.bf16.msra.mxu0 %v167
    %186 = vmatprep.subr.bf16.mxu0 0
    %187 = vmatpush1.bf16.msra.mxu0 %v168
    %188 = vmatprep.subr.bf16.mxu0 0
    %189 = vmatpush1.bf16.msra.mxu0 %v169
    %190 = vmatprep.subr.bf16.mxu0 0
    %191 = vmatpush1.bf16.msra.mxu0 %v170
    %192 = vmatprep.subr.bf16.mxu0 0
    %193 = vmatpush1.bf16.msra.mxu0 %v171
    %194 = vmatprep.subr.bf16.mxu0 0
    %195 = vmatpush1.bf16.msra.mxu0 %v172
    %196 = vmatprep.subr.bf16.mxu0 0
    %197 = vmatpush1.bf16.msra.mxu0 %v173
    %198 = vmatprep.subr.bf16.mxu0 0
    %199 = vmatpush1.bf16.msra.mxu0 0
    %200 = vmatprep.subr.bf16.mxu0 0
    %201 = vmatpush1.bf16.msra.mxu0 0
    %202 = vmatprep.subr.bf16.mxu0 0
    %203 = vmatpush1.bf16.msra.mxu0 0
    %204 = vmatprep.subr.bf16.mxu0 0
    %205 = vmatpush1.bf16.msra.mxu0 0
    %206 = vmatprep.subr.bf16.mxu0 0
    %207 = vmatpush1.bf16.msra.mxu0 0
    %208 = vmatprep.subr.bf16.mxu0 0
    %209 = vmatpush1.bf16.msra.mxu0 0
    %210 = vmatprep.subr.bf16.mxu0 0
    %211 = vmatpush1.bf16.msra.mxu0 0
    %212 = vmatprep.subr.bf16.mxu0 0
    %213 = vmatpush1.bf16.msra.mxu0 0
    %214 = vmatprep.mubr.bf16.mxu0 0
    %215 = vmatmul.mubr.bf16.gmra.mrb[0].mxu0 %v112
    %v216 = vpop.f32.mrb[0].mxu0
    %v217 = vadd.f32 %v133, %v216
    %v218 = vpop.f32.mrb[0].mxu0
    %v219 = vpop.f32.mrb[0].mxu0
    %v220 = vadd.f32 %v133, %v219
    %v221 = vpop.f32.mrb[0].mxu0
    %222 = vdwg.mxu0
    %v223 = vmax.f32 %v217, 0.0
    %v224 = vmax.f32 %v220, 0.0
    %v225 = vpack.c.bf16 %v224, %v223
    %v226 = vld [vmem:[#allocation7] sm:$0xf]
    %v227 = vld [vmem:[#allocation7 + $0x4] sm:$0xf]
    %v228 = vld [vmem:[#allocation7 + $0x8] sm:$0xf]
    %v229 = vld [vmem:[#allocation7 + $0xc] sm:$0xf]
    %v230 = vld [vmem:[#allocation7 + $0x10] sm:$0xf]
    %v231 = vld [vmem:[#allocation7 + $0x14] sm:$0xf]
    %v232 = vld [vmem:[#allocation7 + $0x18] sm:$0xf]
    %v233 = vld [vmem:[#allocation7 + $0x1c] sm:$0xf]
    %v234 = vld [vmem:[#allocation7 + $0x20] sm:$0xf]
    %v235 = vld [vmem:[#allocation7 + $0x24] sm:$0xf]
    %v236 = vld [vmem:[#allocation7 + $0x28] sm:$0xf]
    %v237 = vld [vmem:[#allocation7 + $0x2c] sm:$0xf]
    %v238 = vld [vmem:[#allocation7 + $0x30] sm:$0xf]
    %v239 = vld [vmem:[#allocation7 + $0x34] sm:$0xf]
    %v240 = vld [vmem:[#allocation7 + $0x38] sm:$0xf]
    %v241 = vld [vmem:[#allocation7 + $0x3c] sm:$0xf]
    %v242 = vld [vmem:[%s6 + $0x1] sm:$0x1]
    %v243 = vlaneseq
    %v244 = vshrl.u32 %v243, 7
    %v245 = vsub.s32 0, %v244
    %v246 = vrot.slane %v242, %v245
    %v263 = vunpack.c.l.b16 %v226
    %v264 = vunpack.c.l.b16 %v227
    %v265 = vunpack.c.l.b16 %v228
    %v266 = vunpack.c.l.b16 %v229
    %v267 = vunpack.c.l.b16 %v230
    %v268 = vunpack.c.l.b16 %v231
    %v269 = vunpack.c.l.b16 %v232
    %v270 = vunpack.c.l.b16 %v233
    %v271 = vunpack.c.l.b16 %v234
    %v272 = vunpack.c.l.b16 %v235
    %v273 = vunpack.c.l.b16 %v236
    %v274 = vunpack.c.l.b16 %v237
    %v275 = vunpack.c.l.b16 %v238
    %v276 = vunpack.c.l.b16 %v239
    %v277 = vunpack.c.l.b16 %v240
    %v278 = vunpack.c.l.b16 %v241
    %v279 = vpack.c.b16 %v264, %v263
    %v280 = vpack.c.b16 %v266, %v265
    %v281 = vpack.c.b16 %v268, %v267
    %v282 = vpack.c.b16 %v270, %v269
    %v283 = vpack.c.b16 %v272, %v271
    %v284 = vpack.c.b16 %v274, %v273
    %v285 = vpack.c.b16 %v276, %v275
    %v286 = vpack.c.b16 %v278, %v277
    %295 = vmatprep.subr.bf16.mxu0 0
    %296 = vmatpush1.bf16.msra.mxu0 %v279
    %297 = vmatprep.subr.bf16.mxu0 0
    %298 = vmatpush1.bf16.msra.mxu0 %v280
    %299 = vmatprep.subr.bf16.mxu0 0
    %300 = vmatpush1.bf16.msra.mxu0 %v281
    %301 = vmatprep.subr.bf16.mxu0 0
    %302 = vmatpush1.bf16.msra.mxu0 %v282
    %303 = vmatprep.subr.bf16.mxu0 0
    %304 = vmatpush1.bf16.msra.mxu0 %v283
    %305 = vmatprep.subr.bf16.mxu0 0
    %306 = vmatpush1.bf16.msra.mxu0 %v284
    %307 = vmatprep.subr.bf16.mxu0 0
    %308 = vmatpush1.bf16.msra.mxu0 %v285
    %309 = vmatprep.subr.bf16.mxu0 0
    %310 = vmatpush1.bf16.msra.mxu0 %v286
    %311 = vmatprep.subr.bf16.mxu0 0
    %312 = vmatpush1.bf16.msra.mxu0 0
    %313 = vmatprep.subr.bf16.mxu0 0
    %314 = vmatpush1.bf16.msra.mxu0 0
    %315 = vmatprep.subr.bf16.mxu0 0
    %316 = vmatpush1.bf16.msra.mxu0 0
    %317 = vmatprep.subr.bf16.mxu0 0
    %318 = vmatpush1.bf16.msra.mxu0 0
    %319 = vmatprep.subr.bf16.mxu0 0
    %320 = vmatpush1.bf16.msra.mxu0 0
    %321 = vmatprep.subr.bf16.mxu0 0
    %322 = vmatpush1.bf16.msra.mxu0 0
    %323 = vmatprep.subr.bf16.mxu0 0
    %324 = vmatpush1.bf16.msra.mxu0 0
    %325 = vmatprep.subr.bf16.mxu0 0
    %326 = vmatpush1.bf16.msra.mxu0 0
    %327 = vmatprep.mubr.bf16.mxu0 0
    %328 = vmatmul.mubr.bf16.gmra.mrb[0].mxu0 %v225
    %v329 = vpop.f32.mrb[0].mxu0
    %v330 = vadd.f32 %v246, %v329
    %v331 = vpop.f32.mrb[0].mxu0
    %v332 = vpop.f32.mrb[0].mxu0
    %v333 = vadd.f32 %v246, %v332
    %v334 = vpop.f32.mrb[0].mxu0
    %335 = vdwg.mxu0
    %v336 = vmax.f32 %v330, 0.0
    %v337 = vmax.f32 %v333, 0.0
    %v338 = vpack.c.bf16 %v337, %v336
    %v339 = vld [vmem:[#allocation8] sm:$0xf]
    %v340 = vld [vmem:[#allocation8 + $0x4] sm:$0xf]
    %v341 = vld [vmem:[#allocation8 + $0x8] sm:$0xf]
    %v342 = vld [vmem:[#allocation8 + $0xc] sm:$0xf]
    %v343 = vld [vmem:[#allocation8 + $0x10] sm:$0xf]
    %v344 = vld [vmem:[#allocation8 + $0x14] sm:$0xf]
    %v345 = vld [vmem:[#allocation8 + $0x18] sm:$0xf]
    %v346 = vld [vmem:[#allocation8 + $0x1c] sm:$0xf]
    %v347 = vld [vmem:[#allocation8 + $0x20] sm:$0xf]
    %v348 = vld [vmem:[#allocation8 + $0x24] sm:$0xf]
    %v349 = vld [vmem:[#allocation8 + $0x28] sm:$0xf]
    %v350 = vld [vmem:[#allocation8 + $0x2c] sm:$0xf]
    %v351 = vld [vmem:[#allocation8 + $0x30] sm:$0xf]
    %v352 = vld [vmem:[#allocation8 + $0x34] sm:$0xf]
    %v353 = vld [vmem:[#allocation8 + $0x38] sm:$0xf]
    %v354 = vld [vmem:[#allocation8 + $0x3c] sm:$0xf]
    %v355 = vld [vmem:[%s6 + $0x2] sm:$0x1]
    %v356 = vlaneseq
    %v357 = vshrl.u32 %v356, 7
    %v358 = vsub.s32 0, %v357
    %v359 = vrot.slane %v355, %v358
    %v376 = vunpack.c.l.b16 %v339
    %v377 = vunpack.c.l.b16 %v340
    %v378 = vunpack.c.l.b16 %v341
    %v379 = vunpack.c.l.b16 %v342
    %v380 = vunpack.c.l.b16 %v343
    %v381 = vunpack.c.l.b16 %v344
    %v382 = vunpack.c.l.b16 %v345
    %v383 = vunpack.c.l.b16 %v346
    %v384 = vunpack.c.l.b16 %v347
    %v385 = vunpack.c.l.b16 %v348
    %v386 = vunpack.c.l.b16 %v349
    %v387 = vunpack.c.l.b16 %v350
    %v388 = vunpack.c.l.b16 %v351
    %v389 = vunpack.c.l.b16 %v352
    %v390 = vunpack.c.l.b16 %v353
    %v391 = vunpack.c.l.b16 %v354
    %v392 = vpack.c.b16 %v377, %v376
    %v393 = vpack.c.b16 %v379, %v378
    %v394 = vpack.c.b16 %v381, %v380
    %v395 = vpack.c.b16 %v383, %v382
    %v396 = vpack.c.b16 %v385, %v384
    %v397 = vpack.c.b16 %v387, %v386
    %v398 = vpack.c.b16 %v389, %v388
    %v399 = vpack.c.b16 %v391, %v390
    %408 = vmatprep.subr.bf16.mxu0 0
    %409 = vmatpush1.bf16.msra.mxu0 %v392
    %410 = vmatprep.subr.bf16.mxu0 0
    %411 = vmatpush1.bf16.msra.mxu0 %v393
    %412 = vmatprep.subr.bf16.mxu0 0
    %413 = vmatpush1.bf16.msra.mxu0 %v394
    %414 = vmatprep.subr.bf16.mxu0 0
    %415 = vmatpush1.bf16.msra.mxu0 %v395
    %416 = vmatprep.subr.bf16.mxu0 0
    %417 = vmatpush1.bf16.msra.mxu0 %v396
    %418 = vmatprep.subr.bf16.mxu0 0
    %419 = vmatpush1.bf16.msra.mxu0 %v397
    %420 = vmatprep.subr.bf16.mxu0 0
    %421 = vmatpush1.bf16.msra.mxu0 %v398
    %422 = vmatprep.subr.bf16.mxu0 0
    %423 = vmatpush1.bf16.msra.mxu0 %v399
    %424 = vmatprep.subr.bf16.mxu0 0
    %425 = vmatpush1.bf16.msra.mxu0 0
    %426 = vmatprep.subr.bf16.mxu0 0
    %427 = vmatpush1.bf16.msra.mxu0 0
    %428 = vmatprep.subr.bf16.mxu0 0
    %429 = vmatpush1.bf16.msra.mxu0 0
    %430 = vmatprep.subr.bf16.mxu0 0
    %431 = vmatpush1.bf16.msra.mxu0 0
    %432 = vmatprep.subr.bf16.mxu0 0
    %433 = vmatpush1.bf16.msra.mxu0 0
    %434 = vmatprep.subr.bf16.mxu0 0
    %435 = vmatpush1.bf16.msra.mxu0 0
    %436 = vmatprep.subr.bf16.mxu0 0
    %437 = vmatpush1.bf16.msra.mxu0 0
    %438 = vmatprep.subr.bf16.mxu0 0
    %439 = vmatpush1.bf16.msra.mxu0 0
    %440 = vmatprep.mubr.bf16.mxu0 0
    %441 = vmatmul.mubr.bf16.gmra.mrb[0].mxu0 %v338
    %v442 = vpop.f32.mrb[0].mxu0
    %v443 = vadd.f32 %v359, %v442
    %v444 = vpop.f32.mrb[0].mxu0
    %v445 = vpop.f32.mrb[0].mxu0
    %v446 = vadd.f32 %v359, %v445
    %v447 = vpop.f32.mrb[0].mxu0
    %448 = vdwg.mxu0
    %v449 = vmax.f32 %v443, 0.0
    %v450 = vmax.f32 %v446, 0.0
    %v451 = vpack.c.bf16 %v450, %v449
    %v452 = vld [vmem:[#allocation10] sm:$0xf]
    %v453 = vld [vmem:[#allocation10 + $0x4] sm:$0xf]
    %v454 = vld [vmem:[#allocation10 + $0x8] sm:$0xf]
    %v455 = vld [vmem:[#allocation10 + $0xc] sm:$0xf]
    %v456 = vld [vmem:[#allocation10 + $0x10] sm:$0xf]
    %v457 = vld [vmem:[#allocation10 + $0x14] sm:$0xf]
    %v458 = vld [vmem:[#allocation10 + $0x18] sm:$0xf]
    %v459 = vld [vmem:[#allocation10 + $0x1c] sm:$0xf]
    %v460 = vld [vmem:[#allocation10 + $0x20] sm:$0xf]
    %v461 = vld [vmem:[#allocation10 + $0x24] sm:$0xf]
    %v462 = vld [vmem:[#allocation10 + $0x28] sm:$0xf]
    %v463 = vld [vmem:[#allocation10 + $0x2c] sm:$0xf]
    %v464 = vld [vmem:[#allocation10 + $0x30] sm:$0xf]
    %v465 = vld [vmem:[#allocation10 + $0x34] sm:$0xf]
    %v466 = vld [vmem:[#allocation10 + $0x38] sm:$0xf]
    %v467 = vld [vmem:[#allocation10 + $0x3c] sm:$0xf]
    %v468 = vld [vmem:[%s6 + $0x3] sm:$0x1]
    %v469 = vlaneseq
    %v470 = vshrl.u32 %v469, 7
    %v471 = vsub.s32 0, %v470
    %v472 = vrot.slane %v468, %v471
    %v489 = vunpack.c.l.b16 %v452
    %v490 = vunpack.c.l.b16 %v453
    %v491 = vunpack.c.l.b16 %v454
    %v492 = vunpack.c.l.b16 %v455
    %v493 = vunpack.c.l.b16 %v456
    %v494 = vunpack.c.l.b16 %v457
    %v495 = vunpack.c.l.b16 %v458
    %v496 = vunpack.c.l.b16 %v459
    %v497 = vunpack.c.l.b16 %v460
    %v498 = vunpack.c.l.b16 %v461
    %v499 = vunpack.c.l.b16 %v462
    %v500 = vunpack.c.l.b16 %v463
    %v501 = vunpack.c.l.b16 %v464
    %v502 = vunpack.c.l.b16 %v465
    %v503 = vunpack.c.l.b16 %v466
    %v504 = vunpack.c.l.b16 %v467
    %v505 = vpack.c.b16 %v490, %v489
    %v506 = vpack.c.b16 %v492, %v491
    %v507 = vpack.c.b16 %v494, %v493
    %v508 = vpack.c.b16 %v496, %v495
    %v509 = vpack.c.b16 %v498, %v497
    %v510 = vpack.c.b16 %v500, %v499
    %v511 = vpack.c.b16 %v502, %v501
    %v512 = vpack.c.b16 %v504, %v503
    %521 = vmatprep.subr.bf16.mxu0 0
    %522 = vmatpush1.bf16.msra.mxu0 %v505
    %523 = vmatprep.subr.bf16.mxu0 0
    %524 = vmatpush1.bf16.msra.mxu0 %v506
    %525 = vmatprep.subr.bf16.mxu0 0
    %526 = vmatpush1.bf16.msra.mxu0 %v507
    %527 = vmatprep.subr.bf16.mxu0 0
    %528 = vmatpush1.bf16.msra.mxu0 %v508
    %529 = vmatprep.subr.bf16.mxu0 0
    %530 = vmatpush1.bf16.msra.mxu0 %v509
    %531 = vmatprep.subr.bf16.mxu0 0
    %532 = vmatpush1.bf16.msra.mxu0 %v510
    %533 = vmatprep.subr.bf16.mxu0 0
    %534 = vmatpush1.bf16.msra.mxu0 %v511
    %535 = vmatprep.subr.bf16.mxu0 0
    %536 = vmatpush1.bf16.msra.mxu0 %v512
    %537 = vmatprep.subr.bf16.mxu0 0
    %538 = vmatpush1.bf16.msra.mxu0 0
    %539 = vmatprep.subr.bf16.mxu0 0
    %540 = vmatpush1.bf16.msra.mxu0 0
    %541 = vmatprep.subr.bf16.mxu0 0
    %542 = vmatpush1.bf16.msra.mxu0 0
    %543 = vmatprep.subr.bf16.mxu0 0
    %544 = vmatpush1.bf16.msra.mxu0 0
    %545 = vmatprep.subr.bf16.mxu0 0
    %546 = vmatpush1.bf16.msra.mxu0 0
    %547 = vmatprep.subr.bf16.mxu0 0
    %548 = vmatpush1.bf16.msra.mxu0 0
    %549 = vmatprep.subr.bf16.mxu0 0
    %550 = vmatpush1.bf16.msra.mxu0 0
    %551 = vmatprep.subr.bf16.mxu0 0
    %552 = vmatpush1.bf16.msra.mxu0 0
    %553 = vmatprep.mubr.bf16.mxu0 0
    %554 = vmatmul.mubr.bf16.gmra.mrb[0].mxu0 %v451
    %v555 = vpop.f32.mrb[0].mxu0
    %v556 = vadd.f32 %v472, %v555
    %v557 = vpop.f32.mrb[0].mxu0
    %v558 = vpop.f32.mrb[0].mxu0
    %v559 = vadd.f32 %v472, %v558
    %v560 = vpop.f32.mrb[0].mxu0
    %561 = vdwg.mxu0
    %v562 = vmax.f32 %v556, 0.0
    %v563 = vmax.f32 %v559, 0.0
    %v564 = vpack.c.bf16 %v563, %v562
    %v565 = vld [vmem:[#allocation11] sm:$0xf]
    %v566 = vld [vmem:[#allocation11 + $0x4] sm:$0xf]
    %v567 = vld [vmem:[#allocation11 + $0x8] sm:$0xf]
    %v568 = vld [vmem:[#allocation11 + $0xc] sm:$0xf]
    %v569 = vld [vmem:[#allocation11 + $0x10] sm:$0xf]
    %v570 = vld [vmem:[#allocation11 + $0x14] sm:$0xf]
    %v571 = vld [vmem:[#allocation11 + $0x18] sm:$0xf]
    %v572 = vld [vmem:[#allocation11 + $0x1c] sm:$0xf]
    %v573 = vld [vmem:[#allocation11 + $0x20] sm:$0xf]
    %v574 = vld [vmem:[#allocation11 + $0x24] sm:$0xf]
    %v575 = vld [vmem:[#allocation11 + $0x28] sm:$0xf]
    %v576 = vld [vmem:[#allocation11 + $0x2c] sm:$0xf]
    %v577 = vld [vmem:[#allocation11 + $0x30] sm:$0xf]
    %v578 = vld [vmem:[#allocation11 + $0x34] sm:$0xf]
    %v579 = vld [vmem:[#allocation11 + $0x38] sm:$0xf]
    %v580 = vld [vmem:[#allocation11 + $0x3c] sm:$0xf]
    %v581 = vld [vmem:[%s6 + $0x4] sm:$0x1]
    %v582 = vlaneseq
    %v583 = vshrl.u32 %v582, 7
    %v584 = vsub.s32 0, %v583
    %v585 = vrot.slane %v581, %v584
    %v602 = vunpack.c.l.b16 %v565
    %v603 = vunpack.c.l.b16 %v566
    %v604 = vunpack.c.l.b16 %v567
    %v605 = vunpack.c.l.b16 %v568
    %v606 = vunpack.c.l.b16 %v569
    %v607 = vunpack.c.l.b16 %v570
    %v608 = vunpack.c.l.b16 %v571
    %v609 = vunpack.c.l.b16 %v572
    %v610 = vunpack.c.l.b16 %v573
    %v611 = vunpack.c.l.b16 %v574
    %v612 = vunpack.c.l.b16 %v575
    %v613 = vunpack.c.l.b16 %v576
    %v614 = vunpack.c.l.b16 %v577
    %v615 = vunpack.c.l.b16 %v578
    %v616 = vunpack.c.l.b16 %v579
    %v617 = vunpack.c.l.b16 %v580
    %v618 = vpack.c.b16 %v603, %v602
    %v619 = vpack.c.b16 %v605, %v604
    %v620 = vpack.c.b16 %v607, %v606
    %v621 = vpack.c.b16 %v609, %v608
    %v622 = vpack.c.b16 %v611, %v610
    %v623 = vpack.c.b16 %v613, %v612
    %v624 = vpack.c.b16 %v615, %v614
    %v625 = vpack.c.b16 %v617, %v616
    %634 = vmatprep.subr.bf16.mxu0 0
    %635 = vmatpush1.bf16.msra.mxu0 %v618
    %636 = vmatprep.subr.bf16.mxu0 0
    %637 = vmatpush1.bf16.msra.mxu0 %v619
    %638 = vmatprep.subr.bf16.mxu0 0
    %639 = vmatpush1.bf16.msra.mxu0 %v620
    %640 = vmatprep.subr.bf16.mxu0 0
    %641 = vmatpush1.bf16.msra.mxu0 %v621
    %642 = vmatprep.subr.bf16.mxu0 0
    %643 = vmatpush1.bf16.msra.mxu0 %v622
    %644 = vmatprep.subr.bf16.mxu0 0
    %645 = vmatpush1.bf16.msra.mxu0 %v623
    %646 = vmatprep.subr.bf16.mxu0 0
    %647 = vmatpush1.bf16.msra.mxu0 %v624
    %648 = vmatprep.subr.bf16.mxu0 0
    %649 = vmatpush1.bf16.msra.mxu0 %v625
    %650 = vmatprep.subr.bf16.mxu0 0
    %651 = vmatpush1.bf16.msra.mxu0 0
    %652 = vmatprep.subr.bf16.mxu0 0
    %653 = vmatpush1.bf16.msra.mxu0 0
    %654 = vmatprep.subr.bf16.mxu0 0
    %655 = vmatpush1.bf16.msra.mxu0 0
    %656 = vmatprep.subr.bf16.mxu0 0
    %657 = vmatpush1.bf16.msra.mxu0 0
    %658 = vmatprep.subr.bf16.mxu0 0
    %659 = vmatpush1.bf16.msra.mxu0 0
    %660 = vmatprep.subr.bf16.mxu0 0
    %661 = vmatpush1.bf16.msra.mxu0 0
    %662 = vmatprep.subr.bf16.mxu0 0
    %663 = vmatpush1.bf16.msra.mxu0 0
    %664 = vmatprep.subr.bf16.mxu0 0
    %665 = vmatpush1.bf16.msra.mxu0 0
    %666 = vmatprep.mubr.bf16.mxu0 0
    %667 = vmatmul.mubr.bf16.gmra.mrb[0].mxu0 %v564
    %v668 = vpop.f32.mrb[0].mxu0
    %v669 = vadd.f32 %v585, %v668
    %v670 = vpop.f32.mrb[0].mxu0
    %v671 = vpop.f32.mrb[0].mxu0
    %v672 = vadd.f32 %v585, %v671
    %v673 = vpop.f32.mrb[0].mxu0
    %674 = vdwg.mxu0
    %675 = vst [vmem:[#allocation13] sm:$0xff] %v669
    %676 = vst [vmem:[#allocation13 + $0x8] sm:$0xff] %v672
    // Predicated region
    $region54: #{tpu_custom_call.1} parent=1 // pred_check
      _
    $region55: #{tpu_custom_call.1} parent=1 // pred_check_branch
      %678 = sbr.rel (0) target = $region57
    $region56: #{tpu_custom_call.1} parent=1 // pred_region
      %s680 = ssub.s32 256, 256
      %681 = vsyncadd [#allocation4], %s680
      %s682 = sshll.u32 [#allocation13], 4
      %s683 = int_to_ptr.vmem [resolvable:$true] %s682
      %688 = dma.vmem_to_hbm [thread:$0]  %s683, 256, %s7, [#allocation4], 128, 128, 8
    $region57: #{tpu_custom_call.1} parent=1 // pred_fallthru
      _
    // Predicated region
    $region58: #{tpu_custom_call.1} parent=1 // pred_check
      _
    $region59: #{tpu_custom_call.1} parent=1 // pred_check_branch
      %690 = sbr.rel (0) target = $region61
    $region60: #{tpu_custom_call.1} parent=1 // pred_region
      %691 = dma.done [#allocation4], 256
    $region61: #{tpu_custom_call.1} parent=1 // pred_fallthru
      _
    %692 = vsyncpa [#allocation3], 1
    %693 = vsyncpa [#allocation6], 1
    %694 = vsyncpa [#allocation9], 1
    %695 = vsyncpa [#allocation12], 1
    %696 = vsyncpa [#allocation4], 1

</llo_original>
